<compile_context>
chip_gen: v5e
topology: v5e:2x2
jax: 0.10.0
libtpu: 0.0.40
codegen_flags: <defaults>
</compile_context>

<pallas_src>
import functools
import math

import jax
import jax.numpy as jnp
from jax.experimental import pallas as pl
from jax.experimental.pallas import tpu as pltpu

_LN_EPS = 1e-5
_INV_SQRT2 = 0.7071067811865476  # 1/sqrt(2)


def _round_up(v: int, m: int) -> int:
    return (v + m - 1) // m * m


def _vmem_ceiling_bytes() -> int:
    # Per-core VMEM: 128 MiB on v5e/v6e, 64 MiB per TensorCore on v7x.
    try:
        cap = int(pltpu.get_tpu_info().vmem_capacity_bytes)
    except Exception:               # info unavailable -> assume the smallest (v7x)
        cap = 64 * 1024 * 1024
    return int(min(cap - 4 * 1024 * 1024, 100 * 1024 * 1024))


def _gelu_erf(x):
    """Exact-erf GELU (torch.nn.GELU() default), f32 in/out.

    Abramowitz & Stegun 7.1.26 (|err| <= 1.5e-7), rewritten without the
    sign/select path as
        gelu(x) = relu(x) - 0.5*|x| * poly(t) * exp(-x^2/2),
        t = 1/(1 + p*|x|/sqrt(2)),
    with the divide on the EUP (pl.reciprocal) so the VALU slot stays light.
    """
    a1, a2, a3, a4, a5 = (0.254829592, -0.284496736, 1.421413741,
                          -1.453152027, 1.061405429)
    p = 0.3275911
    az = jnp.abs(x) * _INV_SQRT2                          # |x|/sqrt(2)
    t = pl.reciprocal(1.0 + p * az, approx=True)          # EUP, not VALU
    poly = ((((a5 * t + a4) * t + a3) * t + a2) * t + a1) * t
    q = poly * jnp.exp(-az * az)                          # EUP exp
    return jnp.maximum(x, 0.0) - (_INV_SQRT2 * az) * q    # 0.5*|x| == az/sqrt(2)


def _mlp_kernel_fused(x_ref, g_ref, b_ref, w1_ref, b1_ref, w2_ref, b2_ref, o_ref,
                      *, inv_c, compute_dtype):
    # LayerNorm in f32 (single pass: E[x^2] - mean^2), matching
    # `self.norm(x.float()).type(x.dtype)`.  inv_c = 1/true_C (channel axis may
    # be zero-padded to a multiple of 128).
    x = x_ref[...].astype(jnp.float32)                    # (TM, Cp)
    mean = jnp.sum(x, axis=-1, keepdims=True) * inv_c
    ex2 = jnp.sum(x * x, axis=-1, keepdims=True) * inv_c
    var = ex2 - mean * mean
    xn = (x - mean) * jax.lax.rsqrt(var + _LN_EPS)
    xn = (xn * g_ref[...] + b_ref[...]).astype(compute_dtype)

    # Linear(C->H) + GELU + Linear(H->C); bf16 (or f32) MXU operands, f32 acc.
    h = jnp.dot(xn, w1_ref[...], preferred_element_type=jnp.float32)
    h = _gelu_erf(h + b1_ref[...]).astype(compute_dtype)
    y = jnp.dot(h, w2_ref[...], preferred_element_type=jnp.float32)
    o_ref[...] = (y + b2_ref[...]).astype(o_ref.dtype)


def _mlp_kernel_htiled(x_ref, g_ref, b_ref, w1_ref, b1_ref, w2_ref, b2_ref, o_ref,
                       xn_ref, acc_ref, *, inv_c, compute_dtype):
    # Hidden-dim-tiled accumulator variant: grid = (row_tiles, hidden_tiles),
    # hidden axis is the trailing "arbitrary" reduction axis.
    j = pl.program_id(1)

    @pl.when(j == 0)
    def _():
        x = x_ref[...].astype(jnp.float32)
        mean = jnp.sum(x, axis=-1, keepdims=True) * inv_c
        ex2 = jnp.sum(x * x, axis=-1, keepdims=True) * inv_c
        var = ex2 - mean * mean
        xn = (x - mean) * jax.lax.rsqrt(var + _LN_EPS)
        xn_ref[...] = (xn * g_ref[...] + b_ref[...]).astype(compute_dtype)
        acc_ref[...] = jnp.zeros_like(acc_ref)

    h = jnp.dot(xn_ref[...], w1_ref[...], preferred_element_type=jnp.float32)
    h = _gelu_erf(h + b1_ref[...]).astype(compute_dtype)
    acc_ref[...] += jnp.dot(h, w2_ref[...], preferred_element_type=jnp.float32)

    @pl.when(j == pl.num_programs(1) - 1)
    def _():
        o_ref[...] = (acc_ref[...] + b2_ref[...]).astype(o_ref.dtype)


def mlp_forward(x, gamma, beta, w1, b1, w2, b2, *, block_rows=512,
                compute_dtype=jnp.bfloat16, hidden_block=None):
    """Fused LayerNorm -> Linear -> GELU -> Linear over the last axis of x.

    compute_dtype: dtype fed to the MXU for both matmuls (accumulation is
      always f32).  bf16 is the fast path on all TPU generations.
    hidden_block: force the H-tiled accumulator path with this hidden tile
      (rounded to a multiple of 128).  By default it is only used when the
      weights are too large to keep resident in VMEM.
    """
    orig_shape = x.shape
    C = orig_shape[-1]
    H = w1.shape[-1]
    assert w1.shape == (C, H) and w2.shape == (H, C)
    assert b1.shape == (H,) and b2.shape == (C,)

    compute_dtype = jnp.dtype(compute_dtype)
    in_itemsize = jnp.dtype(x.dtype).itemsize
    c_itemsize = compute_dtype.itemsize

    x2 = x.reshape(-1, C)
    n = x2.shape[0]

    # ---- lane-dense channel / hidden padding (multiples of 128) -------------
    Cp = _round_up(C, 128)
    Hp = _round_up(H, 128)

    w1c = w1.astype(compute_dtype)
    w2c = w2.astype(compute_dtype)
    g2 = gamma.reshape(1, C).astype(jnp.float32)
    be2 = beta.reshape(1, C).astype(jnp.float32)
    b1_2 = b1.reshape(1, H).astype(jnp.float32)
    b2_2 = b2.reshape(1, C).astype(jnp.float32)
    if Cp != C or Hp != H:
        # Padded gamma/beta/weights/biases are zero, so padded lanes carry 0s
        # through LN -> matmul -> GELU -> matmul and are sliced off at the end.
        x2 = jnp.pad(x2, ((0, 0), (0, Cp - C)))
        g2 = jnp.pad(g2, ((0, 0), (0, Cp - C)))
        be2 = jnp.pad(be2, ((0, 0), (0, Cp - C)))
        w1c = jnp.pad(w1c, ((0, Cp - C), (0, Hp - H)))
        b1_2 = jnp.pad(b1_2, ((0, 0), (0, Hp - H)))
        w2c = jnp.pad(w2c, ((0, Hp - H), (0, Cp - C)))
        b2_2 = jnp.pad(b2_2, ((0, 0), (0, Cp - C)))

    # ---- VMEM budget / path selection ---------------------------------------
    vmem_ceiling = _vmem_ceiling_bytes()
    weight_bytes = 2 * Cp * Hp * c_itemsize
    use_htile = hidden_block is not None or weight_bytes > vmem_ceiling // 3

    th = Hp
    if use_htile:
        want = hidden_block if hidden_block is not None else 512
        want = max(128, min(_round_up(want, 128), Hp))
        k = want // 128
        while (Hp // 128) % k != 0:      # th must divide Hp
            k -= 1
        th = k * 128

    def vmem_need(tm_, resident_mult):
        io = 2 * 2 * tm_ * Cp * in_itemsize                 # x + out, 2 buffers each
        temps = tm_ * th * 4 + 4 * tm_ * Cp * 4             # GELU tile + f32 LN temps
        if use_htile:
            streamed_w = 2 * (2 * Cp * th * c_itemsize + th * 4)   # W1/W2/b1 slabs
            resident = resident_mult * 3 * Cp * 4                  # gamma, beta, b2
            scratch = tm_ * Cp * (c_itemsize + 4)                  # xn + acc scratch
            return io + temps + streamed_w + resident + scratch
        resident = resident_mult * (weight_bytes + (Hp + 3 * Cp) * 4)
        return io + temps + resident

    # ---- row tile ------------------------------------------------------------
    n_up = max(8, _round_up(n, 8))
    tm = max(8, min(block_rows, n_up) // 8 * 8)
    if n_up >= 16:          # >= 2 row steps so both v7x TensorCores get work
        tm = min(tm, max(8, (n_up // 2) // 8 * 8))
    while tm > 8 and vmem_need(tm, 1) > vmem_ceiling:
        tm = max(8, (tm // 2) // 8 * 8)

    n_pad = pl.cdiv(n, tm) * tm
    if n_pad != n:
        x2 = jnp.pad(x2, ((0, n_pad - n), (0, 0)))

    vmem_limit = int(min(vmem_ceiling,
                         max(32 * 1024 * 1024,
                             vmem_need(tm, 2) + 2 * 1024 * 1024)))

    cost = pl.CostEstimate(
        flops=int(4 * n_pad * Cp * Hp),
        transcendentals=int(2 * n_pad * Hp),     # exp + approx-recip per GELU elem
        bytes_accessed=int(2 * n_pad * Cp * in_itemsize + weight_bytes
                           + (Hp + 3 * Cp) * 4),
    )

    def run(single_buffer_resident):
        res = ({"pipeline_mode": pl.Buffered(1)} if single_buffer_resident else {})
        if use_htile:
            kern = functools.partial(_mlp_kernel_htiled, inv_c=1.0 / C,
                                     compute_dtype=compute_dtype)
            grid = (n_pad // tm, Hp // th)
            dims = ("parallel", "arbitrary")
            in_specs = [
                pl.BlockSpec((tm, Cp), lambda i, j: (i, 0)),         # x row tile
                pl.BlockSpec((1, Cp), lambda i, j: (0, 0), **res),   # LN gamma
                pl.BlockSpec((1, Cp), lambda i, j: (0, 0), **res),   # LN beta
                pl.BlockSpec((Cp, th), lambda i, j: (0, j)),         # W1 column slab
                pl.BlockSpec((1, th), lambda i, j: (0, j)),          # b1 slab
                pl.BlockSpec((th, Cp), lambda i, j: (j, 0)),         # W2 row slab
                pl.BlockSpec((1, Cp), lambda i, j: (0, 0), **res),   # b2
            ]
            out_specs = pl.BlockSpec((tm, Cp), lambda i, j: (i, 0))
            scratch = [pltpu.VMEM((tm, Cp), compute_dtype),          # LN output
                       pltpu.VMEM((tm, Cp), jnp.float32)]            # f32 accumulator
        else:
            kern = functools.partial(_mlp_kernel_fused, inv_c=1.0 / C,
                                     compute_dtype=compute_dtype)
            grid = (n_pad // tm,)
            dims = ("parallel",)
            in_specs = [
                pl.BlockSpec((tm, Cp), lambda i: (i, 0)),            # x (streamed)
                pl.BlockSpec((1, Cp), lambda i: (0, 0), **res),      # LN gamma
                pl.BlockSpec((1, Cp), lambda i: (0, 0), **res),      # LN beta
                pl.BlockSpec((Cp, Hp), lambda i: (0, 0), **res),     # W1 (resident)
                pl.BlockSpec((1, Hp), lambda i: (0, 0), **res),      # b1
                pl.BlockSpec((Hp, Cp), lambda i: (0, 0), **res),     # W2 (resident)
                pl.BlockSpec((1, Cp), lambda i: (0, 0), **res),      # b2
            ]
            out_specs = pl.BlockSpec((tm, Cp), lambda i: (i, 0))
            scratch = []

        grid_spec = pltpu.PrefetchScalarGridSpec(
            num_scalar_prefetch=0, grid=grid,
            in_specs=in_specs, out_specs=out_specs, scratch_shapes=scratch)
        return pl.pallas_call(
            kern,
            out_shape=jax.ShapeDtypeStruct((n_pad, Cp), x.dtype),
            grid_spec=grid_spec,
            compiler_params=pltpu.CompilerParams(
                dimension_semantics=dims, vmem_limit_bytes=vmem_limit),
            cost_estimate=cost,
        )(x2, g2, be2, w1c, b1_2, w2c, b2_2)

    try:
        out = jax.block_until_ready(run(True))
    except Exception:
        # pl.Buffered(1) (single-buffered resident operands) not supported on
        # this jax version -> fall back to default pipelining.
        out = run(False)

    if n_pad != n or Cp != C:
        out = out[:n, :C]
    return out.reshape(orig_shape)


class MLP:
    """Pallas port of transformer_flow.MLP: LayerNorm -> Linear -> GELU -> Linear."""

    def __init__(self, channels: int, expansion: int, key: jax.Array):
        hidden = channels * expansion
        k1, k2, k3, k4 = jax.random.split(key, 4)
        lim1 = 1.0 / math.sqrt(channels)
        lim2 = 1.0 / math.sqrt(hidden)
        # torch.nn.Linear default init; weights stored pre-transposed to (in, out).
        # Master copies stay f32; mlp_forward casts the matmul operands to the
        # requested MXU compute dtype (bf16 by default).
        self.w1 = jax.random.uniform(k1, (channels, hidden), jnp.float32, -lim1, lim1)
        self.b1 = jax.random.uniform(k2, (hidden,), jnp.float32, -lim1, lim1)
        self.w2 = jax.random.uniform(k3, (hidden, channels), jnp.float32, -lim2, lim2)
        self.b2 = jax.random.uniform(k4, (channels,), jnp.float32, -lim2, lim2)
        # torch.nn.LayerNorm default affine init (weight=1, bias=0).
        self.gamma = jnp.ones((channels,), jnp.float32)
        self.beta = jnp.zeros((channels,), jnp.float32)

    def __call__(self, x, *, block_rows=512, compute_dtype=jnp.bfloat16,
                 hidden_block=None):
        return mlp_forward(x, self.gamma, self.beta, self.w1, self.b1,
                           self.w2, self.b2, block_rows=block_rows,
                           compute_dtype=compute_dtype, hidden_block=hidden_block)


def mlp_reference(x, gamma, beta, w1, b1, w2, b2):
    """Pure-JAX reference mirroring the PyTorch forward (f32, HIGHEST precision)."""
    xf = x.astype(jnp.float32)
    mean = jnp.mean(xf, axis=-1, keepdims=True)
    var = jnp.mean((xf - mean) ** 2, axis=-1, keepdims=True)
    xn = (xf - mean) / jnp.sqrt(var + _LN_EPS) * gamma + beta
    xn = xn.astype(x.dtype)
    h = jnp.dot(xn, w1, precision=jax.lax.Precision.HIGHEST) + b1
    h = jax.nn.gelu(h, approximate=False).astype(x.dtype)
    y = jnp.dot(h, w2, precision=jax.lax.Precision.HIGHEST) + b2
    return y.astype(x.dtype)


if __name__ == "__main__":
    key = jax.random.PRNGKey(0)
    k_x, k_p, k_g, k_b, k_p2, k_x2 = jax.random.split(key, 6)

    B, T, C, E = 2, 8, 128, 4          # (batch, seq, channels), expansion=4 -> H=512
    x = jax.random.normal(k_x, (B, T, C), dtype=jnp.float32)

    mlp = MLP(C, E, k_p)
    # Perturb the LayerNorm affine params so that code path is exercised non-trivially.
    mlp.gamma = mlp.gamma + 0.1 * jax.random.normal(k_g, (C,), jnp.float32)
    mlp.beta = 0.05 * jax.random.normal(k_b, (C,), jnp.float32)
    y_ref = mlp_reference(x, mlp.gamma, mlp.beta, mlp.w1, mlp.b1, mlp.w2, mlp.b2)

    # Default path: bf16 MXU operands, f32 accumulation, resident weights.
    y = jax.block_until_ready(mlp(x))
    assert y.shape == x.shape and y.dtype == x.dtype
    assert jnp.allclose(y, y_ref, rtol=2e-2, atol=2e-2), \
        f"bf16 path max err {float(jnp.max(jnp.abs(y - y_ref)))}"

    # f32 compute path (tighter structural check).
    y32 = jax.block_until_ready(mlp(x, compute_dtype=jnp.float32))
    assert jnp.allclose(y32, y_ref, rtol=5e-3, atol=5e-3), \
        f"f32 path max err {float(jnp.max(jnp.abs(y32 - y_ref)))}"

    # Forced multi-step row grid.
    y_rows = jax.block_until_ready(mlp(x, block_rows=8))
    assert jnp.allclose(y_rows, y_ref, rtol=2e-2, atol=2e-2), "row-tiled mismatch"

    # Forced H-tiled accumulator path (4 hidden steps of 128).
    y_h = jax.block_until_ready(mlp(x, hidden_block=128))
    assert jnp.allclose(y_h, y_ref, rtol=2e-2, atol=2e-2), "H-tiled mismatch"

    # Ragged row count + channels/hidden not multiples of 128 (pad paths).
    C2, E2 = 72, 3                      # hidden=216 -> padded to (Cp=128, Hp=256)
    mlp2 = MLP(C2, E2, k_p2)
    x_odd = jax.random.normal(k_x2, (B, 5, C2), dtype=jnp.float32)
    y_odd = jax.block_until_ready(mlp2(x_odd))
    y_odd_ref = mlp_reference(x_odd, mlp2.gamma, mlp2.beta,
                              mlp2.w1, mlp2.b1, mlp2.w2, mlp2.b2)
    assert jnp.allclose(y_odd, y_odd_ref, rtol=2e-2, atol=2e-2), "padded-C mismatch"

    print("KERNEL_OK")
</pallas_src>

<mosaic_0001>
module attributes {stable_mosaic.version = 11 : i64} {
  func.func @_mlp_kernel_fused(%arg0: i32, %arg1: memref<8x128xf32, #tpu.memory_space<vmem>>, %arg2: memref<1x128xf32, #tpu.memory_space<vmem>>, %arg3: memref<1x128xf32, #tpu.memory_space<vmem>>, %arg4: memref<128x512xbf16, #tpu.memory_space<vmem>>, %arg5: memref<1x512xf32, #tpu.memory_space<vmem>>, %arg6: memref<512x128xbf16, #tpu.memory_space<vmem>>, %arg7: memref<1x128xf32, #tpu.memory_space<vmem>>, %arg8: memref<8x128xf32, #tpu.memory_space<vmem>>) attributes {dimension_semantics = [#tpu.dimension_semantics<parallel>], iteration_bounds = array<i64: 2>, scalar_prefetch = 0 : i64, scratch_operands = 0 : i64, tpu.core_type = #tpu.core_type<tc>, window_params = [{transform_indices = @transform_0, window_bounds = array<i64: 8, 128>}, {pipeline_mode = #tpu.pipeline_mode<synchronous>, transform_indices = @transform_1, window_bounds = array<i64: 1, 128>}, {pipeline_mode = #tpu.pipeline_mode<synchronous>, transform_indices = @transform_2, window_bounds = array<i64: 1, 128>}, {pipeline_mode = #tpu.pipeline_mode<synchronous>, transform_indices = @transform_3, window_bounds = array<i64: 128, 512>}, {pipeline_mode = #tpu.pipeline_mode<synchronous>, transform_indices = @transform_4, window_bounds = array<i64: 1, 512>}, {pipeline_mode = #tpu.pipeline_mode<synchronous>, transform_indices = @transform_5, window_bounds = array<i64: 512, 128>}, {pipeline_mode = #tpu.pipeline_mode<synchronous>, transform_indices = @transform_6, window_bounds = array<i64: 1, 128>}, {transform_indices = @transform_7, window_bounds = array<i64: 8, 128>}]} {
    %c0 = arith.constant 0 : index
    %c0_0 = arith.constant 0 : index
    %0 = vector.load %arg1[%c0, %c0_0] : memref<8x128xf32, #tpu.memory_space<vmem>>, vector<8x128xf32>
    %cst = arith.constant dense<0.000000e+00> : vector<8xf32>
    %1 = vector.multi_reduction <add>, %0, %cst [1] : vector<8x128xf32> to vector<8xf32>
    %2 = vector.shape_cast %1 : vector<8xf32> to vector<8x1xf32>
    %cst_1 = arith.constant 7.812500e-03 : f32
    %3 = vector.broadcast %cst_1 : f32 to vector<8x1xf32>
    %4 = arith.mulf %2, %3 : vector<8x1xf32>
    %5 = arith.mulf %0, %0 : vector<8x128xf32>
    %cst_2 = arith.constant dense<0.000000e+00> : vector<8xf32>
    %6 = vector.multi_reduction <add>, %5, %cst_2 [1] : vector<8x128xf32> to vector<8xf32>
    %7 = vector.shape_cast %6 : vector<8xf32> to vector<8x1xf32>
    %cst_3 = arith.constant 7.812500e-03 : f32
    %8 = vector.broadcast %cst_3 : f32 to vector<8x1xf32>
    %9 = arith.mulf %7, %8 : vector<8x1xf32>
    %10 = arith.mulf %4, %4 : vector<8x1xf32>
    %11 = arith.subf %9, %10 : vector<8x1xf32>
    %12 = vector.broadcast %4 : vector<8x1xf32> to vector<8x128xf32>
    %13 = arith.subf %0, %12 : vector<8x128xf32>
    %cst_4 = arith.constant 9.99999974E-6 : f32
    %14 = vector.broadcast %cst_4 : f32 to vector<8x1xf32>
    %15 = arith.addf %11, %14 : vector<8x1xf32>
    %16 = math.rsqrt %15 : vector<8x1xf32>
    %17 = vector.broadcast %16 : vector<8x1xf32> to vector<8x128xf32>
    %18 = arith.mulf %13, %17 : vector<8x128xf32>
    %c0_5 = arith.constant 0 : index
    %c0_6 = arith.constant 0 : index
    %19 = vector.load %arg2[%c0_5, %c0_6] : memref<1x128xf32, #tpu.memory_space<vmem>>, vector<1x128xf32>
    %20 = vector.broadcast %19 : vector<1x128xf32> to vector<8x128xf32>
    %21 = arith.mulf %18, %20 : vector<8x128xf32>
    %c0_7 = arith.constant 0 : index
    %c0_8 = arith.constant 0 : index
    %22 = vector.load %arg3[%c0_7, %c0_8] : memref<1x128xf32, #tpu.memory_space<vmem>>, vector<1x128xf32>
    %23 = vector.broadcast %22 : vector<1x128xf32> to vector<8x128xf32>
    %24 = arith.addf %21, %23 : vector<8x128xf32>
    %25 = arith.truncf %24 : vector<8x128xf32> to vector<8x128xbf16>
    %c0_9 = arith.constant 0 : index
    %c0_10 = arith.constant 0 : index
    %26 = vector.load %arg4[%c0_9, %c0_10] : memref<128x512xbf16, #tpu.memory_space<vmem>>, vector<128x512xbf16>
    %cst_11 = arith.constant dense<0.000000e+00> : vector<8x512xf32>
    %27 = tpu.matmul %25, %26, %cst_11 {dimension_numbers = #tpu.dot_dimension_numbers<[1], [0], [0], [1], [0, 0, 1, 1], [], []>} : vector<8x128xbf16>, vector<128x512xbf16>, vector<8x512xf32> -> vector<8x512xf32>
    %c0_12 = arith.constant 0 : index
    %c0_13 = arith.constant 0 : index
    %28 = vector.load %arg5[%c0_12, %c0_13] : memref<1x512xf32, #tpu.memory_space<vmem>>, vector<1x512xf32>
    %29 = vector.broadcast %28 : vector<1x512xf32> to vector<8x512xf32>
    %30 = arith.addf %27, %29 : vector<8x512xf32>
    %31 = math.absf %30 : vector<8x512xf32>
    %cst_14 = arith.constant 0.707106769 : f32
    %32 = vector.broadcast %cst_14 : f32 to vector<8x512xf32>
    %33 = arith.mulf %31, %32 : vector<8x512xf32>
    %cst_15 = arith.constant 0.327591091 : f32
    %34 = vector.broadcast %cst_15 : f32 to vector<8x512xf32>
    %35 = arith.mulf %34, %33 : vector<8x512xf32>
    %cst_16 = arith.constant 1.000000e+00 : f32
    %36 = vector.broadcast %cst_16 : f32 to vector<8x512xf32>
    %37 = arith.addf %36, %35 : vector<8x512xf32>
    %38 = tpu.reciprocal %37 {approx = true} : vector<8x512xf32> -> vector<8x512xf32>
    %cst_17 = arith.constant 1.06140542 : f32
    %39 = vector.broadcast %cst_17 : f32 to vector<8x512xf32>
    %40 = arith.mulf %39, %38 : vector<8x512xf32>
    %cst_18 = arith.constant -1.45315206 : f32
    %41 = vector.broadcast %cst_18 : f32 to vector<8x512xf32>
    %42 = arith.addf %40, %41 : vector<8x512xf32>
    %43 = arith.mulf %42, %38 : vector<8x512xf32>
    %cst_19 = arith.constant 1.42141378 : f32
    %44 = vector.broadcast %cst_19 : f32 to vector<8x512xf32>
    %45 = arith.addf %43, %44 : vector<8x512xf32>
    %46 = arith.mulf %45, %38 : vector<8x512xf32>
    %cst_20 = arith.constant -0.284496725 : f32
    %47 = vector.broadcast %cst_20 : f32 to vector<8x512xf32>
    %48 = arith.addf %46, %47 : vector<8x512xf32>
    %49 = arith.mulf %48, %38 : vector<8x512xf32>
    %cst_21 = arith.constant 0.254829586 : f32
    %50 = vector.broadcast %cst_21 : f32 to vector<8x512xf32>
    %51 = arith.addf %49, %50 : vector<8x512xf32>
    %52 = arith.mulf %51, %38 : vector<8x512xf32>
    %cst_22 = arith.constant 0.000000e+00 : f32
    %53 = vector.broadcast %cst_22 : f32 to vector<8x512xf32>
    %54 = arith.subf %53, %33 : vector<8x512xf32>
    %55 = arith.mulf %54, %33 : vector<8x512xf32>
    %56 = math.exp %55 : vector<8x512xf32>
    %57 = arith.mulf %52, %56 : vector<8x512xf32>
    %cst_23 = arith.constant 0.000000e+00 : f32
    %58 = vector.broadcast %cst_23 : f32 to vector<8x512xf32>
    %59 = arith.maximumf %30, %58 : vector<8x512xf32>
    %cst_24 = arith.constant 0.707106769 : f32
    %60 = vector.broadcast %cst_24 : f32 to vector<8x512xf32>
    %61 = arith.mulf %60, %33 : vector<8x512xf32>
    %62 = arith.mulf %61, %57 : vector<8x512xf32>
    %63 = arith.subf %59, %62 : vector<8x512xf32>
    %64 = arith.truncf %63 : vector<8x512xf32> to vector<8x512xbf16>
    %c0_25 = arith.constant 0 : index
    %c0_26 = arith.constant 0 : index
    %65 = vector.load %arg6[%c0_25, %c0_26] : memref<512x128xbf16, #tpu.memory_space<vmem>>, vector<512x128xbf16>
    %cst_27 = arith.constant dense<0.000000e+00> : vector<8x128xf32>
    %66 = tpu.matmul %64, %65, %cst_27 {dimension_numbers = #tpu.dot_dimension_numbers<[1], [0], [0], [1], [0, 0, 1, 1], [], []>} : vector<8x512xbf16>, vector<512x128xbf16>, vector<8x128xf32> -> vector<8x128xf32>
    %c0_28 = arith.constant 0 : index
    %c0_29 = arith.constant 0 : index
    %67 = vector.load %arg7[%c0_28, %c0_29] : memref<1x128xf32, #tpu.memory_space<vmem>>, vector<1x128xf32>
    %68 = vector.broadcast %67 : vector<1x128xf32> to vector<8x128xf32>
    %69 = arith.addf %66, %68 : vector<8x128xf32>
    %c0_30 = arith.constant 0 : index
    %c0_31 = arith.constant 0 : index
    %70 = vector.load %arg8[%c0_30, %c0_31] : memref<8x128xf32, #tpu.memory_space<vmem>>, vector<8x128xf32>
    tpu.vector_store %arg8[%c0_30, %c0_31], %69 {strides = array<i32>} : memref<8x128xf32, #tpu.memory_space<vmem>>, vector<8x128xf32>,
    return
  }
  func.func @transform_0(%arg0: i32) -> (i32, i32) {
    %c0_i32 = arith.constant 0 : i32
    %c0_i32_0 = arith.constant 0 : i32
    return %arg0, %c0_i32 : i32, i32
  }
  func.func @transform_1(%arg0: i32) -> (i32, i32) {
    %c0_i32 = arith.constant 0 : i32
    %c0_i32_0 = arith.constant 0 : i32
    %c0_i32_1 = arith.constant 0 : i32
    return %c0_i32, %c0_i32_0 : i32, i32
  }
  func.func @transform_2(%arg0: i32) -> (i32, i32) {
    %c0_i32 = arith.constant 0 : i32
    %c0_i32_0 = arith.constant 0 : i32
    %c0_i32_1 = arith.constant 0 : i32
    return %c0_i32, %c0_i32_0 : i32, i32
  }
  func.func @transform_3(%arg0: i32) -> (i32, i32) {
    %c0_i32 = arith.constant 0 : i32
    %c0_i32_0 = arith.constant 0 : i32
    %c0_i32_1 = arith.constant 0 : i32
    return %c0_i32, %c0_i32_0 : i32, i32
  }
  func.func @transform_4(%arg0: i32) -> (i32, i32) {
    %c0_i32 = arith.constant 0 : i32
    %c0_i32_0 = arith.constant 0 : i32
    %c0_i32_1 = arith.constant 0 : i32
    return %c0_i32, %c0_i32_0 : i32, i32
  }
  func.func @transform_5(%arg0: i32) -> (i32, i32) {
    %c0_i32 = arith.constant 0 : i32
    %c0_i32_0 = arith.constant 0 : i32
    %c0_i32_1 = arith.constant 0 : i32
    return %c0_i32, %c0_i32_0 : i32, i32
  }
  func.func @transform_6(%arg0: i32) -> (i32, i32) {
    %c0_i32 = arith.constant 0 : i32
    %c0_i32_0 = arith.constant 0 : i32
    %c0_i32_1 = arith.constant 0 : i32
    return %c0_i32, %c0_i32_0 : i32, i32
  }
  func.func @transform_7(%arg0: i32) -> (i32, i32) {
    %c0_i32 = arith.constant 0 : i32
    %c0_i32_0 = arith.constant 0 : i32
    return %arg0, %c0_i32 : i32, i32
  }
}

module attributes {stable_mosaic.version = 11 : i64} {
  func.func @_mlp_kernel_fused(%arg0: i32, %arg1: memref<8x128xf32, #tpu.memory_space<vmem>>, %arg2: memref<1x128xf32, #tpu.memory_space<vmem>>, %arg3: memref<1x128xf32, #tpu.memory_space<vmem>>, %arg4: memref<128x512xbf16, #tpu.memory_space<vmem>>, %arg5: memref<1x512xf32, #tpu.memory_space<vmem>>, %arg6: memref<512x128xbf16, #tpu.memory_space<vmem>>, %arg7: memref<1x128xf32, #tpu.memory_space<vmem>>, %arg8: memref<8x128xf32, #tpu.memory_space<vmem>>) attributes {dimension_semantics = [#tpu.dimension_semantics<parallel>], iteration_bounds = array<i64: 2>, scalar_prefetch = 0 : i64, scratch_operands = 0 : i64, tpu.core_type = #tpu.core_type<tc>, window_params = [{transform_indices = @transform_0, window_bounds = array<i64: 8, 128>}, {pipeline_mode = #tpu.pipeline_mode<synchronous>, transform_indices = @transform_1, window_bounds = array<i64: 1, 128>}, {pipeline_mode = #tpu.pipeline_mode<synchronous>, transform_indices = @transform_2, window_bounds = array<i64: 1, 128>}, {pipeline_mode = #tpu.pipeline_mode<synchronous>, transform_indices = @transform_3, window_bounds = array<i64: 128, 512>}, {pipeline_mode = #tpu.pipeline_mode<synchronous>, transform_indices = @transform_4, window_bounds = array<i64: 1, 512>}, {pipeline_mode = #tpu.pipeline_mode<synchronous>, transform_indices = @transform_5, window_bounds = array<i64: 512, 128>}, {pipeline_mode = #tpu.pipeline_mode<synchronous>, transform_indices = @transform_6, window_bounds = array<i64: 1, 128>}, {transform_indices = @transform_7, window_bounds = array<i64: 8, 128>}]} {
    %c0 = arith.constant 0 : index
    %c0_0 = arith.constant 0 : index
    %0 = vector.load %arg1[%c0, %c0_0] : memref<8x128xf32, #tpu.memory_space<vmem>>, vector<8x128xf32>
    %cst = arith.constant dense<0.000000e+00> : vector<8xf32>
    %1 = vector.multi_reduction <add>, %0, %cst [1] : vector<8x128xf32> to vector<8xf32>
    %2 = vector.shape_cast %1 : vector<8xf32> to vector<8x1xf32>
    %cst_1 = arith.constant 7.812500e-03 : f32
    %3 = vector.broadcast %cst_1 : f32 to vector<8x1xf32>
    %4 = arith.mulf %2, %3 : vector<8x1xf32>
    %5 = arith.mulf %0, %0 : vector<8x128xf32>
    %cst_2 = arith.constant dense<0.000000e+00> : vector<8xf32>
    %6 = vector.multi_reduction <add>, %5, %cst_2 [1] : vector<8x128xf32> to vector<8xf32>
    %7 = vector.shape_cast %6 : vector<8xf32> to vector<8x1xf32>
    %cst_3 = arith.constant 7.812500e-03 : f32
    %8 = vector.broadcast %cst_3 : f32 to vector<8x1xf32>
    %9 = arith.mulf %7, %8 : vector<8x1xf32>
    %10 = arith.mulf %4, %4 : vector<8x1xf32>
    %11 = arith.subf %9, %10 : vector<8x1xf32>
    %12 = vector.broadcast %4 : vector<8x1xf32> to vector<8x128xf32>
    %13 = arith.subf %0, %12 : vector<8x128xf32>
    %cst_4 = arith.constant 9.99999974E-6 : f32
    %14 = vector.broadcast %cst_4 : f32 to vector<8x1xf32>
    %15 = arith.addf %11, %14 : vector<8x1xf32>
    %16 = math.rsqrt %15 : vector<8x1xf32>
    %17 = vector.broadcast %16 : vector<8x1xf32> to vector<8x128xf32>
    %18 = arith.mulf %13, %17 : vector<8x128xf32>
    %c0_5 = arith.constant 0 : index
    %c0_6 = arith.constant 0 : index
    %19 = vector.load %arg2[%c0_5, %c0_6] : memref<1x128xf32, #tpu.memory_space<vmem>>, vector<1x128xf32>
    %20 = vector.broadcast %19 : vector<1x128xf32> to vector<8x128xf32>
    %21 = arith.mulf %18, %20 : vector<8x128xf32>
    %c0_7 = arith.constant 0 : index
    %c0_8 = arith.constant 0 : index
    %22 = vector.load %arg3[%c0_7, %c0_8] : memref<1x128xf32, #tpu.memory_space<vmem>>, vector<1x128xf32>
    %23 = vector.broadcast %22 : vector<1x128xf32> to vector<8x128xf32>
    %24 = arith.addf %21, %23 : vector<8x128xf32>
    %25 = arith.truncf %24 : vector<8x128xf32> to vector<8x128xbf16>
    %c0_9 = arith.constant 0 : index
    %c0_10 = arith.constant 0 : index
    %26 = vector.load %arg4[%c0_9, %c0_10] : memref<128x512xbf16, #tpu.memory_space<vmem>>, vector<128x512xbf16>
    %cst_11 = arith.constant dense<0.000000e+00> : vector<8x512xf32>
    %27 = tpu.matmul %25, %26, %cst_11 {dimension_numbers = #tpu.dot_dimension_numbers<[1], [0], [0], [1], [0, 0, 1, 1], [], []>} : vector<8x128xbf16>, vector<128x512xbf16>, vector<8x512xf32> -> vector<8x512xf32>
    %c0_12 = arith.constant 0 : index
    %c0_13 = arith.constant 0 : index
    %28 = vector.load %arg5[%c0_12, %c0_13] : memref<1x512xf32, #tpu.memory_space<vmem>>, vector<1x512xf32>
    %29 = vector.broadcast %28 : vector<1x512xf32> to vector<8x512xf32>
    %30 = arith.addf %27, %29 : vector<8x512xf32>
    %31 = math.absf %30 : vector<8x512xf32>
    %cst_14 = arith.constant 0.707106769 : f32
    %32 = vector.broadcast %cst_14 : f32 to vector<8x512xf32>
    %33 = arith.mulf %31, %32 : vector<8x512xf32>
    %cst_15 = arith.constant 0.327591091 : f32
    %34 = vector.broadcast %cst_15 : f32 to vector<8x512xf32>
    %35 = arith.mulf %34, %33 : vector<8x512xf32>
    %cst_16 = arith.constant 1.000000e+00 : f32
    %36 = vector.broadcast %cst_16 : f32 to vector<8x512xf32>
    %37 = arith.addf %36, %35 : vector<8x512xf32>
    %38 = tpu.reciprocal %37 {approx = true} : vector<8x512xf32> -> vector<8x512xf32>
    %cst_17 = arith.constant 1.06140542 : f32
    %39 = vector.broadcast %cst_17 : f32 to vector<8x512xf32>
    %40 = arith.mulf %39, %38 : vector<8x512xf32>
    %cst_18 = arith.constant -1.45315206 : f32
    %41 = vector.broadcast %cst_18 : f32 to vector<8x512xf32>
    %42 = arith.addf %40, %41 : vector<8x512xf32>
    %43 = arith.mulf %42, %38 : vector<8x512xf32>
    %cst_19 = arith.constant 1.42141378 : f32
    %44 = vector.broadcast %cst_19 : f32 to vector<8x512xf32>
    %45 = arith.addf %43, %44 : vector<8x512xf32>
    %46 = arith.mulf %45, %38 : vector<8x512xf32>
    %cst_20 = arith.constant -0.284496725 : f32
    %47 = vector.broadcast %cst_20 : f32 to vector<8x512xf32>
    %48 = arith.addf %46, %47 : vector<8x512xf32>
    %49 = arith.mulf %48, %38 : vector<8x512xf32>
    %cst_21 = arith.constant 0.254829586 : f32
    %50 = vector.broadcast %cst_21 : f32 to vector<8x512xf32>
    %51 = arith.addf %49, %50 : vector<8x512xf32>
    %52 = arith.mulf %51, %38 : vector<8x512xf32>
    %cst_22 = arith.constant 0.000000e+00 : f32
    %53 = vector.broadcast %cst_22 : f32 to vector<8x512xf32>
    %54 = arith.subf %53, %33 : vector<8x512xf32>
    %55 = arith.mulf %54, %33 : vector<8x512xf32>
    %56 = math.exp %55 : vector<8x512xf32>
    %57 = arith.mulf %52, %56 : vector<8x512xf32>
    %cst_23 = arith.constant 0.000000e+00 : f32
    %58 = vector.broadcast %cst_23 : f32 to vector<8x512xf32>
    %59 = arith.maximumf %30, %58 : vector<8x512xf32>
    %cst_24 = arith.constant 0.707106769 : f32
    %60 = vector.broadcast %cst_24 : f32 to vector<8x512xf32>
    %61 = arith.mulf %60, %33 : vector<8x512xf32>
    %62 = arith.mulf %61, %57 : vector<8x512xf32>
    %63 = arith.subf %59, %62 : vector<8x512xf32>
    %64 = arith.truncf %63 : vector<8x512xf32> to vector<8x512xbf16>
    %c0_25 = arith.constant 0 : index
    %c0_26 = arith.constant 0 : index
    %65 = vector.load %arg6[%c0_25, %c0_26] : memref<512x128xbf16, #tpu.memory_space<vmem>>, vector<512x128xbf16>
    %cst_27 = arith.constant dense<0.000000e+00> : vector<8x128xf32>
    %66 = tpu.matmul %64, %65, %cst_27 {dimension_numbers = #tpu.dot_dimension_numbers<[1], [0], [0], [1], [0, 0, 1, 1], [], []>} : vector<8x512xbf16>, vector<512x128xbf16>, vector<8x128xf32> -> vector<8x128xf32>
    %c0_28 = arith.constant 0 : index
    %c0_29 = arith.constant 0 : index
    %67 = vector.load %arg7[%c0_28, %c0_29] : memref<1x128xf32, #tpu.memory_space<vmem>>, vector<1x128xf32>
    %68 = vector.broadcast %67 : vector<1x128xf32> to vector<8x128xf32>
    %69 = arith.addf %66, %68 : vector<8x128xf32>
    %c0_30 = arith.constant 0 : index
    %c0_31 = arith.constant 0 : index
    %70 = vector.load %arg8[%c0_30, %c0_31] : memref<8x128xf32, #tpu.memory_space<vmem>>, vector<8x128xf32>
    tpu.vector_store %arg8[%c0_30, %c0_31], %69 {strides = array<i32>} : memref<8x128xf32, #tpu.memory_space<vmem>>, vector<8x128xf32>,
    return
  }
  func.func @transform_0(%arg0: i32) -> (i32, i32) {
    %c0_i32 = arith.constant 0 : i32
    %c0_i32_0 = arith.constant 0 : i32
    return %arg0, %c0_i32 : i32, i32
  }
  func.func @transform_1(%arg0: i32) -> (i32, i32) {
    %c0_i32 = arith.constant 0 : i32
    %c0_i32_0 = arith.constant 0 : i32
    %c0_i32_1 = arith.constant 0 : i32
    return %c0_i32, %c0_i32_0 : i32, i32
  }
  func.func @transform_2(%arg0: i32) -> (i32, i32) {
    %c0_i32 = arith.constant 0 : i32
    %c0_i32_0 = arith.constant 0 : i32
    %c0_i32_1 = arith.constant 0 : i32
    return %c0_i32, %c0_i32_0 : i32, i32
  }
  func.func @transform_3(%arg0: i32) -> (i32, i32) {
    %c0_i32 = arith.constant 0 : i32
    %c0_i32_0 = arith.constant 0 : i32
    %c0_i32_1 = arith.constant 0 : i32
    return %c0_i32, %c0_i32_0 : i32, i32
  }
  func.func @transform_4(%arg0: i32) -> (i32, i32) {
    %c0_i32 = arith.constant 0 : i32
    %c0_i32_0 = arith.constant 0 : i32
    %c0_i32_1 = arith.constant 0 : i32
    return %c0_i32, %c0_i32_0 : i32, i32
  }
  func.func @transform_5(%arg0: i32) -> (i32, i32) {
    %c0_i32 = arith.constant 0 : i32
    %c0_i32_0 = arith.constant 0 : i32
    %c0_i32_1 = arith.constant 0 : i32
    return %c0_i32, %c0_i32_0 : i32, i32
  }
  func.func @transform_6(%arg0: i32) -> (i32, i32) {
    %c0_i32 = arith.constant 0 : i32
    %c0_i32_0 = arith.constant 0 : i32
    %c0_i32_1 = arith.constant 0 : i32
    return %c0_i32, %c0_i32_0 : i32, i32
  }
  func.func @transform_7(%arg0: i32) -> (i32, i32) {
    %c0_i32 = arith.constant 0 : i32
    %c0_i32_0 = arith.constant 0 : i32
    return %arg0, %c0_i32 : i32, i32
  }
}

</mosaic_0001>

<llo_original>
// kernel: tpu_custom_call.1
$region0: #{tpu_custom_call.1}
  #allocation0 [shape = 'u32[]', space=smem, size = 0x4, offset = 0x4, fixed_abs, tag = 'smem constant byte address 0x4 - core index']
  #allocation1 [shape = 'u32[72,128]{1,0:T(1,128)}', space=vmem, size = 0x9000, scoped, tag = 'internal scratch']
  %s0 = inlined_call_operand.hbm [shape: f32[16,128], index: 0, kind: input, shape index: {}]
  %s1 = inlined_call_operand.hbm [shape: f32[1,128], index: 1, kind: input, shape index: {}]
  %s2 = inlined_call_operand.vmem [shape: f32[1,128], index: 2, kind: input, shape index: {}]
  %s3 = inlined_call_operand.hbm [shape: bf16[128,512], index: 3, kind: input, shape index: {}]
  %s4 = inlined_call_operand.hbm [shape: f32[1,512], index: 4, kind: input, shape index: {}]
  %s5 = inlined_call_operand.hbm [shape: bf16[512,128], index: 5, kind: input, shape index: {}]
  %s6 = inlined_call_operand.vmem [shape: f32[1,128], index: 6, kind: input, shape index: {}]
  %s7 = inlined_call_operand.hbm [shape: f32[16,128], index: 7, kind: output, shape index: {}]
  %s8 = sld [smem:[#allocation0]]
  $region81: #{tpu_custom_call.1} parent=0
    _
  %s10 = ssub.s32 1, %s8
  %s11 = scalar_select 0, %s10, %s8
  $region1: #{tpu_custom_call.1} parent=0
    #allocation2 [shape = 'u8[8192]{0}', space=vmem, size = 0x2000, scoped, tag = 'input window, operand 0']
    #allocation3 [shape = 's32[2]{0}', space=sflag, size = 0x8, scoped, tag = 'scoped memory for tpu_custom_call.1']
    #allocation4 [shape = 's32[2]{0}', space=sflag, size = 0x8, scoped, tag = 'scoped memory for tpu_custom_call.1']
    #allocation5 [shape = 'u8[512]{0}', space=vmem, size = 0x400, scoped, tag = 'input window, operand 1, single buffered']
    #allocation6 [shape = 's32[1]{0}', space=sflag, size = 0x4, scoped, tag = 'scoped memory for tpu_custom_call.1']
    #allocation7 [shape = 'u8[131072]{0}', space=vmem, size = 0x20000, scoped, tag = 'input window, operand 3, single buffered']
    #allocation8 [shape = 'u8[2048]{0}', space=vmem, size = 0x800, scoped, tag = 'input window, operand 4, single buffered']
    #allocation9 [shape = 's32[1]{0}', space=sflag, size = 0x4, scoped, tag = 'scoped memory for tpu_custom_call.1']
    #allocation10 [shape = 'u8[131072]{0}', space=vmem, size = 0x20000, scoped, tag = 'input window, operand 5, single buffered']
    #allocation11 [shape = 'u8[8192]{0}', space=vmem, size = 0x2000, scoped, tag = 'output window, operand 0']
    %12 = vsyncpa [#allocation3], 0
    %s13 = scalar_lea.sflag [#allocation3], 1
    %14 = vsyncpa %s13, 0
    %15 = vsyncpa [#allocation6], 0
    %16 = vsyncpa [#allocation9], 0
    %17 = vsyncpa [#allocation4], 0
    %s18 = scalar_lea.sflag [#allocation4], 1
    %19 = vsyncpa %s18, 0
    loop: start=0, step=1, limit=4
    $region2: #{tpu_custom_call.1} parent=1 // loop_pre_header
      _
    $region3: #{tpu_custom_call.1} parent=1 // loop_header
      %s21 = sphi 0, %s25
      %p22 = scmp.ge.s32.totalorder %s21, 4
      %s31 = sphi 0, %s33
      %s34 = sphi 0, %s31
      %s35 = sphi 0, %s34
      %s51 = sphi 0, %s35
      %s55 = sphi 0, %s55
      %s57 = sphi 0, %s55
      %s58 = sphi 0, %s57
      %s72 = sphi 0, %s58
      %s76 = sphi 0, %s76
      %s78 = sphi 0, %s76
      %s79 = sphi 0, %s78
      %s93 = sphi 0, %s79
      %s97 = sphi 0, %s97
      %s99 = sphi 0, %s97
      %s100 = sphi 0, %s99
      %s114 = sphi 0, %s100
      %s118 = sphi 0, %s118
      %s120 = sphi 0, %s118
      %s121 = sphi 0, %s120
      %s135 = sphi 0, %s121
      %s139 = sphi 0, %s139
      %s141 = sphi 0, %s139
      %s142 = sphi 0, %s141
      %s156 = sphi 0, %s142
      %s160 = sphi 0, %s160
      %s162 = sphi 0, %s160
      %s163 = sphi 0, %s162
      %s177 = sphi 0, %s163
      %s183 = sphi 0, %s185
      %s186 = sphi 0, %s183
      %s187 = sphi 0, %s186
      %s203 = sphi 0, %s187
    $region4: #{tpu_custom_call.1} parent=1 // loop_header_branch
      %24 = sbr.rel (%p22) target = $region8
    $region5: #{tpu_custom_call.1} parent=1 // loop_body
      %s26 = ssub.s32 %s21, 1
      %s27 = ssub.s32 %s21, 2
      %s28 = sadd.s32 %s21, 1
      %s29 = ssub.s32 %s21, %s28
      %p30 = scmp.eq.s32.totalorder %s29, 0
      %s32 = sadd.s32 %s31, 1
      %s33 = scalar_select %p30, %s31, %s32
      %p36 = pneg %p30
      %p37 = scmp.eq.s32.totalorder %s21, 1
      %p38 = por %p36, %p37
      %p39 = scmp.ne.s32.totalorder %s31, %s34
      %p40 = scmp.eq.s32.totalorder %s21, 0
      %p41 = por %p39, %p40
      %p42 = scmp.ne.s32.totalorder %s31, %s34
      %p43 = scmp.eq.s32.totalorder %s26, 1
      %p44 = por %p42, %p43
      %p45 = scmp.ne.s32.totalorder %s34, %s35
      %p46 = scmp.eq.s32.totalorder %s26, 0
      %p47 = por %p45, %p46
      %p48 = scmp.ne.s32.totalorder %s34, %s35
      %p49 = scmp.eq.s32.totalorder %s27, 1
      %p50 = por %p48, %p49
      %p52 = scmp.ne.s32.totalorder %s35, %s51
      %p53 = scmp.eq.s32.totalorder %s27, 0
      %p54 = por %p52, %p53
      %s56 = sadd.s32 %s55, 1
      %p59 = scmp.eq.s32.totalorder %s21, 1
      %p60 = scmp.ne.s32.totalorder %s55, %s57
      %p61 = scmp.eq.s32.totalorder %s21, 0
      %p62 = por %p60, %p61
      %p63 = scmp.ne.s32.totalorder %s55, %s57
      %p64 = scmp.eq.s32.totalorder %s26, 1
      %p65 = por %p63, %p64
      %p66 = scmp.ne.s32.totalorder %s57, %s58
      %p67 = scmp.eq.s32.totalorder %s26, 0
      %p68 = por %p66, %p67
      %p69 = scmp.ne.s32.totalorder %s57, %s58
      %p70 = scmp.eq.s32.totalorder %s27, 1
      %p71 = por %p69, %p70
      %p73 = scmp.ne.s32.totalorder %s58, %s72
      %p74 = scmp.eq.s32.totalorder %s27, 0
      %p75 = por %p73, %p74
      %s77 = sadd.s32 %s76, 1
      %p80 = scmp.eq.s32.totalorder %s21, 1
      %p81 = scmp.ne.s32.totalorder %s76, %s78
      %p82 = scmp.eq.s32.totalorder %s21, 0
      %p83 = por %p81, %p82
      %p84 = scmp.ne.s32.totalorder %s76, %s78
      %p85 = scmp.eq.s32.totalorder %s26, 1
      %p86 = por %p84, %p85
      %p87 = scmp.ne.s32.totalorder %s78, %s79
      %p88 = scmp.eq.s32.totalorder %s26, 0
      %p89 = por %p87, %p88
      %p90 = scmp.ne.s32.totalorder %s78, %s79
      %p91 = scmp.eq.s32.totalorder %s27, 1
      %p92 = por %p90, %p91
      %p94 = scmp.ne.s32.totalorder %s79, %s93
      %p95 = scmp.eq.s32.totalorder %s27, 0
      %p96 = por %p94, %p95
      %s98 = sadd.s32 %s97, 1
      %p101 = scmp.eq.s32.totalorder %s21, 1
      %p102 = scmp.ne.s32.totalorder %s97, %s99
      %p103 = scmp.eq.s32.totalorder %s21, 0
      %p104 = por %p102, %p103
      %p105 = scmp.ne.s32.totalorder %s97, %s99
      %p106 = scmp.eq.s32.totalorder %s26, 1
      %p107 = por %p105, %p106
      %p108 = scmp.ne.s32.totalorder %s99, %s100
      %p109 = scmp.eq.s32.totalorder %s26, 0
      %p110 = por %p108, %p109
      %p111 = scmp.ne.s32.totalorder %s99, %s100
      %p112 = scmp.eq.s32.totalorder %s27, 1
      %p113 = por %p111, %p112
      %p115 = scmp.ne.s32.totalorder %s100, %s114
      %p116 = scmp.eq.s32.totalorder %s27, 0
      %p117 = por %p115, %p116
      %s119 = sadd.s32 %s118, 1
      %p122 = scmp.eq.s32.totalorder %s21, 1
      %p123 = scmp.ne.s32.totalorder %s118, %s120
      %p124 = scmp.eq.s32.totalorder %s21, 0
      %p125 = por %p123, %p124
      %p126 = scmp.ne.s32.totalorder %s118, %s120
      %p127 = scmp.eq.s32.totalorder %s26, 1
      %p128 = por %p126, %p127
      %p129 = scmp.ne.s32.totalorder %s120, %s121
      %p130 = scmp.eq.s32.totalorder %s26, 0
      %p131 = por %p129, %p130
      %p132 = scmp.ne.s32.totalorder %s120, %s121
      %p133 = scmp.eq.s32.totalorder %s27, 1
      %p134 = por %p132, %p133
      %p136 = scmp.ne.s32.totalorder %s121, %s135
      %p137 = scmp.eq.s32.totalorder %s27, 0
      %p138 = por %p136, %p137
      %s140 = sadd.s32 %s139, 1
      %p143 = scmp.eq.s32.totalorder %s21, 1
      %p144 = scmp.ne.s32.totalorder %s139, %s141
      %p145 = scmp.eq.s32.totalorder %s21, 0
      %p146 = por %p144, %p145
      %p147 = scmp.ne.s32.totalorder %s139, %s141
      %p148 = scmp.eq.s32.totalorder %s26, 1
      %p149 = por %p147, %p148
      %p150 = scmp.ne.s32.totalorder %s141, %s142
      %p151 = scmp.eq.s32.totalorder %s26, 0
      %p152 = por %p150, %p151
      %p153 = scmp.ne.s32.totalorder %s141, %s142
      %p154 = scmp.eq.s32.totalorder %s27, 1
      %p155 = por %p153, %p154
      %p157 = scmp.ne.s32.totalorder %s142, %s156
      %p158 = scmp.eq.s32.totalorder %s27, 0
      %p159 = por %p157, %p158
      %s161 = sadd.s32 %s160, 1
      %p164 = scmp.eq.s32.totalorder %s21, 1
      %p165 = scmp.ne.s32.totalorder %s160, %s162
      %p166 = scmp.eq.s32.totalorder %s21, 0
      %p167 = por %p165, %p166
      %p168 = scmp.ne.s32.totalorder %s160, %s162
      %p169 = scmp.eq.s32.totalorder %s26, 1
      %p170 = por %p168, %p169
      %p171 = scmp.ne.s32.totalorder %s162, %s163
      %p172 = scmp.eq.s32.totalorder %s26, 0
      %p173 = por %p171, %p172
      %p174 = scmp.ne.s32.totalorder %s162, %s163
      %p175 = scmp.eq.s32.totalorder %s27, 1
      %p176 = por %p174, %p175
      %p178 = scmp.ne.s32.totalorder %s163, %s177
      %p179 = scmp.eq.s32.totalorder %s27, 0
      %p180 = por %p178, %p179
      %s181 = ssub.s32 %s21, %s28
      %p182 = scmp.eq.s32.totalorder %s181, 0
      %s184 = sadd.s32 %s183, 1
      %s185 = scalar_select %p182, %s183, %s184
      %p188 = pneg %p182
      %p189 = scmp.eq.s32.totalorder %s21, 1
      %p190 = por %p188, %p189
      %p191 = scmp.ne.s32.totalorder %s183, %s186
      %p192 = scmp.eq.s32.totalorder %s21, 0
      %p193 = por %p191, %p192
      %p194 = scmp.ne.s32.totalorder %s183, %s186
      %p195 = scmp.eq.s32.totalorder %s26, 1
      %p196 = por %p194, %p195
      %p197 = scmp.ne.s32.totalorder %s186, %s187
      %p198 = scmp.eq.s32.totalorder %s26, 0
      %p199 = por %p197, %p198
      %p200 = scmp.ne.s32.totalorder %s186, %s187
      %p201 = scmp.eq.s32.totalorder %s27, 1
      %p202 = por %p200, %p201
      %p204 = scmp.ne.s32.totalorder %s187, %s203
      %p205 = scmp.eq.s32.totalorder %s27, 0
      %p206 = por %p204, %p205
      %p207 = scmp.le.s32.totalorder 1, %s21
      %p208 = scmp.lt.s32.totalorder %s21, 3
      %p209 = pnand %p207, %p208
      %p210 = pneg %p209
      // Predicated region
      $region9: #{tpu_custom_call.1} parent=5 // pred_check
        _
      $region10: #{tpu_custom_call.1} parent=5 // pred_check_branch
        %212 = sbr.rel (%p209) target = $region12
      $region11: #{tpu_custom_call.1} parent=5 // pred_region
        %s213 = ssub.s32 %s21, 1
        // Predicated region
        $region13: #{tpu_custom_call.1} parent=11 // pred_check
          %p214 = pneg %p68
        $region14: #{tpu_custom_call.1} parent=11 // pred_check_branch
          %216 = sbr.rel (%p214) target = $region16
        $region15: #{tpu_custom_call.1} parent=11 // pred_region
          %218 = vsyncadd [#allocation6], 0
          %s220 = sshll.u32 %s1, 4
          %s221 = int_to_ptr.hbm [resolvable:$true] %s220
          %s222 = sshll.u32 [#allocation5], 4
          %s223 = int_to_ptr.vmem [resolvable:$true] %s222
          %225 = dma.hbm_to_vmem [thread:$0]  %s221, 16, %s223, [#allocation6]
        $region16: #{tpu_custom_call.1} parent=11 // pred_fallthru
          _
        // Predicated region
        $region17: #{tpu_custom_call.1} parent=11 // pred_check
          %p226 = pneg %p89
        $region18: #{tpu_custom_call.1} parent=11 // pred_check_branch
          %228 = sbr.rel (%p226) target = $region20
        $region19: #{tpu_custom_call.1} parent=11 // pred_region
          _
        $region20: #{tpu_custom_call.1} parent=11 // pred_fallthru
          _
        // Predicated region
        $region21: #{tpu_custom_call.1} parent=11 // pred_check
          %p229 = pneg %p110
        $region22: #{tpu_custom_call.1} parent=11 // pred_check_branch
          %231 = sbr.rel (%p229) target = $region24
        $region23: #{tpu_custom_call.1} parent=11 // pred_region
          %233 = vsyncadd [#allocation6], 0
          %s234 = sshll.u32 %s3, 4
          %s235 = int_to_ptr.hbm [resolvable:$true] %s234
          %s236 = sshll.u32 [#allocation7], 4
          %s237 = int_to_ptr.vmem [resolvable:$true] %s236
          %242 = dma.hbm_to_vmem [thread:$0]  %s235, 4096, %s237, [#allocation6], 256, 256, 16
        $region24: #{tpu_custom_call.1} parent=11 // pred_fallthru
          _
        // Predicated region
        $region25: #{tpu_custom_call.1} parent=11 // pred_check
          %p243 = pneg %p131
        $region26: #{tpu_custom_call.1} parent=11 // pred_check_branch
          %245 = sbr.rel (%p243) target = $region28
        $region27: #{tpu_custom_call.1} parent=11 // pred_region
          %247 = vsyncadd [#allocation9], 0
          %s249 = sshll.u32 %s4, 4
          %s250 = int_to_ptr.hbm [resolvable:$true] %s249
          %s251 = sshll.u32 [#allocation8], 4
          %s252 = int_to_ptr.vmem [resolvable:$true] %s251
          %254 = dma.hbm_to_vmem [thread:$0]  %s250, 64, %s252, [#allocation9]
        $region28: #{tpu_custom_call.1} parent=11 // pred_fallthru
          _
        // Predicated region
        $region29: #{tpu_custom_call.1} parent=11 // pred_check
          %p255 = pneg %p152
        $region30: #{tpu_custom_call.1} parent=11 // pred_check_branch
          %257 = sbr.rel (%p255) target = $region32
        $region31: #{tpu_custom_call.1} parent=11 // pred_region
          %259 = vsyncadd [#allocation9], 0
          %s260 = sshll.u32 %s5, 4
          %s261 = int_to_ptr.hbm [resolvable:$true] %s260
          %s262 = sshll.u32 [#allocation10], 4
          %s263 = int_to_ptr.vmem [resolvable:$true] %s262
          %268 = dma.hbm_to_vmem [thread:$0]  %s261, 4096, %s263, [#allocation9], 64, 64, 4
        $region32: #{tpu_custom_call.1} parent=11 // pred_fallthru
          _
        // Predicated region
        $region33: #{tpu_custom_call.1} parent=11 // pred_check
          %p269 = pneg %p173
        $region34: #{tpu_custom_call.1} parent=11 // pred_check_branch
          %271 = sbr.rel (%p269) target = $region36
        $region35: #{tpu_custom_call.1} parent=11 // pred_region
          _
        $region36: #{tpu_custom_call.1} parent=11 // pred_fallthru
          _
      $region12: #{tpu_custom_call.1} parent=5 // pred_fallthru
        _
      %p272 = scmp.lt.s32.totalorder %s21, 2
      // Predicated region
      $region37: #{tpu_custom_call.1} parent=5 // pred_check
        %p273 = pneg %p272
      $region38: #{tpu_custom_call.1} parent=5 // pred_check_branch
        %275 = sbr.rel (%p273) target = $region40
      $region39: #{tpu_custom_call.1} parent=5 // pred_region
        // Predicated region
        $region41: #{tpu_custom_call.1} parent=39 // pred_check
          %p276 = pneg %p41
        $region42: #{tpu_custom_call.1} parent=39 // pred_check_branch
          %278 = sbr.rel (%p276) target = $region44
        $region43: #{tpu_custom_call.1} parent=39 // pred_region
          %s279 = sand.u32 %s31, 1
          %s280 = scalar_lea.sflag [#allocation3], %s279
          %s281 = sand.u32 %s31, 1
          %s282 = smul.addr %s281, 8
          %s283 = scalar_lea.vmem [#allocation2], %s282
          %285 = vsyncadd %s280, 0
          %s286 = smul.addr %s21, 8
          %s287 = scalar_lea.hbm %s0, %s286
          %s289 = sshll.u32 %s287, 4
          %s290 = int_to_ptr.hbm [resolvable:$true] %s289
          %s291 = sshll.u32 %s283, 4
          %s292 = int_to_ptr.vmem [resolvable:$true] %s291
          %294 = dma.hbm_to_vmem [thread:$0]  %s290, 128, %s292, %s280
        $region44: #{tpu_custom_call.1} parent=39 // pred_fallthru
          _
      $region40: #{tpu_custom_call.1} parent=5 // pred_fallthru
        _
      %p295 = scmp.le.s32.totalorder 1, %s21
      %p296 = scmp.lt.s32.totalorder %s21, 3
      %p297 = pnand %p295, %p296
      %p298 = pneg %p297
      // Predicated region
      $region45: #{tpu_custom_call.1} parent=5 // pred_check
        _
      $region46: #{tpu_custom_call.1} parent=5 // pred_check_branch
        %300 = sbr.rel (%p297) target = $region48
      $region47: #{tpu_custom_call.1} parent=5 // pred_region
        %s301 = ssub.s32 %s21, 1
        %s302 = sand.u32 %s34, 1
        %s303 = scalar_lea.sflag [#allocation3], %s302
        %s304 = sand.u32 %s34, 1
        %s305 = smul.addr %s304, 8
        %s306 = scalar_lea.vmem [#allocation2], %s305
        // Predicated region
        $region49: #{tpu_custom_call.1} parent=47 // pred_check
          %p307 = pneg %p47
        $region50: #{tpu_custom_call.1} parent=47 // pred_check_branch
          %309 = sbr.rel (%p307) target = $region52
        $region51: #{tpu_custom_call.1} parent=47 // pred_region
          %311 = dma.done %s303, 128
        $region52: #{tpu_custom_call.1} parent=47 // pred_fallthru
          _
        // Predicated region
        $region53: #{tpu_custom_call.1} parent=47 // pred_check
          %p312 = pneg %p68
        $region54: #{tpu_custom_call.1} parent=47 // pred_check_branch
          %314 = sbr.rel (%p312) target = $region56
        $region55: #{tpu_custom_call.1} parent=47 // pred_region
          %316 = dma.done [#allocation6], 16
        $region56: #{tpu_custom_call.1} parent=47 // pred_fallthru
          _
        // Predicated region
        $region57: #{tpu_custom_call.1} parent=47 // pred_check
          %p317 = pneg %p110
        $region58: #{tpu_custom_call.1} parent=47 // pred_check_branch
          %319 = sbr.rel (%p317) target = $region60
        $region59: #{tpu_custom_call.1} parent=47 // pred_region
          %321 = dma.done [#allocation6], 4096
        $region60: #{tpu_custom_call.1} parent=47 // pred_fallthru
          _
        // Predicated region
        $region61: #{tpu_custom_call.1} parent=47 // pred_check
          %p322 = pneg %p131
        $region62: #{tpu_custom_call.1} parent=47 // pred_check_branch
          %324 = sbr.rel (%p322) target = $region64
        $region63: #{tpu_custom_call.1} parent=47 // pred_region
          %326 = dma.done [#allocation9], 64
        $region64: #{tpu_custom_call.1} parent=47 // pred_fallthru
          _
        // Predicated region
        $region65: #{tpu_custom_call.1} parent=47 // pred_check
          %p327 = pneg %p152
        $region66: #{tpu_custom_call.1} parent=47 // pred_check_branch
          %329 = sbr.rel (%p327) target = $region68
        $region67: #{tpu_custom_call.1} parent=47 // pred_region
          %331 = dma.done [#allocation9], 4096
        $region68: #{tpu_custom_call.1} parent=47 // pred_fallthru
          _
        %s332 = sand.u32 %s34, 1
        %s333 = scalar_lea.sflag [#allocation3], %s332
        %s334 = sand.u32 %s34, 1
        %s335 = smul.addr %s334, 8
        %s336 = scalar_lea.vmem [#allocation2], %s335
        %p337 = pneg %p47
        %p338 = pneg %p44
        %p339 = pneg %p68
        %p340 = pneg %p65
        %p341 = pneg %p89
        %p342 = pneg %p86
        %p343 = pneg %p110
        %p344 = pneg %p107
        %p345 = pneg %p131
        %p346 = pneg %p128
        %p347 = pneg %p152
        %p348 = pneg %p149
        %p349 = pneg %p173
        %p350 = pneg %p170
        %p351 = pneg %p199
        %p352 = pneg %p196
        %s353 = sand.u32 %s186, 1
        %s354 = scalar_lea.sflag [#allocation4], %s353
        %s355 = sand.u32 %s186, 1
        %s356 = smul.addr %s355, 8
        %s357 = scalar_lea.vmem [#allocation11], %s356
        %v358 = vld [vmem:[%s306] sm:$0xff]
        %359 = vadd.xlane.f32.xlu0 %v358
        %v360 = vpop.xlane.xlu0 %359
        %v361 = vmul.f32 %v360, 0.0078125
        %v362 = vmul.f32 %v358, %v358
        %363 = vadd.xlane.f32.xlu0 %v362
        %v364 = vpop.xlane.xlu0 %363
        %v365 = vmul.f32 %v364, 0.0078125
        %v366 = vmul.f32 %v361, %v361
        %v367 = vsub.f32 %v365, %v366
        %v368 = vsub.f32 %v358, %v361
        %v369 = vadd.f32 %v367, 1e-05
        %v370 = vrsqrt.pop %v369
        %v371 = vmul.f32 %v370, %v369
        %v372 = vmul.f32 %v371, %v370
        %v373 = vmul.f32 0.5, %v372
        %v374 = vsub.f32 1.5, %v373
        %v375 = vmul.f32 %v370, %v374
        %vm376 = vweird.f32 %v369
        %vm377 = vweird.f32 %v370
        %vm378 = vmor %vm376, %vm377
        %v379 = vsel %vm378, %v370, %v375
        %v380 = vmul.f32 %v368, %v379
        %v381 = vld [vmem:[#allocation5] sm:$0x1]
        %v383 = vperm.slane %v381, 0
        %v385 = vmul.f32 %v380, %v383
        %v386 = vld [vmem:[%s2] sm:$0x1]
        %v388 = vperm.slane %v386, 0
        %v390 = vadd.f32 %v385, %v388
        %v391 = vpack.c.bf16 %v390, %v390
        %v392 = vld [vmem:[#allocation7] sm:$0xff]
        %v393 = vld [vmem:[#allocation7 + $0x8] sm:$0xff]
        %v394 = vld [vmem:[#allocation7 + $0x10] sm:$0xff]
        %v395 = vld [vmem:[#allocation7 + $0x18] sm:$0xff]
        %v396 = vld [vmem:[#allocation7 + $0x20] sm:$0xff]
        %v397 = vld [vmem:[#allocation7 + $0x28] sm:$0xff]
        %v398 = vld [vmem:[#allocation7 + $0x30] sm:$0xff]
        %v399 = vld [vmem:[#allocation7 + $0x38] sm:$0xff]
        %v400 = vld [vmem:[#allocation7 + $0x40] sm:$0xff]
        %v401 = vld [vmem:[#allocation7 + $0x48] sm:$0xff]
        %v402 = vld [vmem:[#allocation7 + $0x50] sm:$0xff]
        %v403 = vld [vmem:[#allocation7 + $0x58] sm:$0xff]
        %v404 = vld [vmem:[#allocation7 + $0x60] sm:$0xff]
        %v405 = vld [vmem:[#allocation7 + $0x68] sm:$0xff]
        %v406 = vld [vmem:[#allocation7 + $0x70] sm:$0xff]
        %v407 = vld [vmem:[#allocation7 + $0x78] sm:$0xff]
        %v408 = vld [vmem:[#allocation7 + $0x80] sm:$0xff]
        %v409 = vld [vmem:[#allocation7 + $0x88] sm:$0xff]
        %v410 = vld [vmem:[#allocation7 + $0x90] sm:$0xff]
        %v411 = vld [vmem:[#allocation7 + $0x98] sm:$0xff]
        %v412 = vld [vmem:[#allocation7 + $0xa0] sm:$0xff]
        %v413 = vld [vmem:[#allocation7 + $0xa8] sm:$0xff]
        %v414 = vld [vmem:[#allocation7 + $0xb0] sm:$0xff]
        %v415 = vld [vmem:[#allocation7 + $0xb8] sm:$0xff]
        %v416 = vld [vmem:[#allocation7 + $0xc0] sm:$0xff]
        %v417 = vld [vmem:[#allocation7 + $0xc8] sm:$0xff]
        %v418 = vld [vmem:[#allocation7 + $0xd0] sm:$0xff]
        %v419 = vld [vmem:[#allocation7 + $0xd8] sm:$0xff]
        %v420 = vld [vmem:[#allocation7 + $0xe0] sm:$0xff]
        %v421 = vld [vmem:[#allocation7 + $0xe8] sm:$0xff]
        %v422 = vld [vmem:[#allocation7 + $0xf0] sm:$0xff]
        %v423 = vld [vmem:[#allocation7 + $0xf8] sm:$0xff]
        %v424 = vld [vmem:[#allocation8] sm:$0xf]
        %v426 = vperm.slane %v424, 0
        %v427 = vperm.slane %v424, 1
        %v428 = vperm.slane %v424, 2
        %v429 = vperm.slane %v424, 3
        %v466 = vunpack.c.l.b16 %v392
        %v467 = vunpack.c.h.b16 %v392
        %v468 = vunpack.c.l.b16 %v393
        %v469 = vunpack.c.h.b16 %v393
        %v470 = vunpack.c.l.b16 %v394
        %v471 = vunpack.c.h.b16 %v394
        %v472 = vunpack.c.l.b16 %v395
        %v473 = vunpack.c.h.b16 %v395
        %v474 = vunpack.c.l.b16 %v396
        %v475 = vunpack.c.h.b16 %v396
        %v476 = vunpack.c.l.b16 %v397
        %v477 = vunpack.c.h.b16 %v397
        %v478 = vunpack.c.l.b16 %v398
        %v479 = vunpack.c.h.b16 %v398
        %v480 = vunpack.c.l.b16 %v399
        %v481 = vunpack.c.h.b16 %v399
        %v482 = vunpack.c.l.b16 %v400
        %v483 = vunpack.c.h.b16 %v400
        %v484 = vunpack.c.l.b16 %v401
        %v485 = vunpack.c.h.b16 %v401
        %v486 = vunpack.c.l.b16 %v402
        %v487 = vunpack.c.h.b16 %v402
        %v488 = vunpack.c.l.b16 %v403
        %v489 = vunpack.c.h.b16 %v403
        %v490 = vunpack.c.l.b16 %v404
        %v491 = vunpack.c.h.b16 %v404
        %v492 = vunpack.c.l.b16 %v405
        %v493 = vunpack.c.h.b16 %v405
        %v494 = vunpack.c.l.b16 %v406
        %v495 = vunpack.c.h.b16 %v406
        %v496 = vunpack.c.l.b16 %v407
        %v497 = vunpack.c.h.b16 %v407
        %v498 = vunpack.c.l.b16 %v408
        %v499 = vunpack.c.h.b16 %v408
        %v500 = vunpack.c.l.b16 %v409
        %v501 = vunpack.c.h.b16 %v409
        %v502 = vunpack.c.l.b16 %v410
        %v503 = vunpack.c.h.b16 %v410
        %v504 = vunpack.c.l.b16 %v411
        %v505 = vunpack.c.h.b16 %v411
        %v506 = vunpack.c.l.b16 %v412
        %v507 = vunpack.c.h.b16 %v412
        %v508 = vunpack.c.l.b16 %v413
        %v509 = vunpack.c.h.b16 %v413
        %v510 = vunpack.c.l.b16 %v414
        %v511 = vunpack.c.h.b16 %v414
        %v512 = vunpack.c.l.b16 %v415
        %v513 = vunpack.c.h.b16 %v415
        %v514 = vunpack.c.l.b16 %v416
        %v515 = vunpack.c.h.b16 %v416
        %v516 = vunpack.c.l.b16 %v417
        %v517 = vunpack.c.h.b16 %v417
        %v518 = vunpack.c.l.b16 %v418
        %v519 = vunpack.c.h.b16 %v418
        %v520 = vunpack.c.l.b16 %v419
        %v521 = vunpack.c.h.b16 %v419
        %v522 = vunpack.c.l.b16 %v420
        %v523 = vunpack.c.h.b16 %v420
        %v524 = vunpack.c.l.b16 %v421
        %v525 = vunpack.c.h.b16 %v421
        %v526 = vunpack.c.l.b16 %v422
        %v527 = vunpack.c.h.b16 %v422
        %v528 = vunpack.c.l.b16 %v423
        %v529 = vunpack.c.h.b16 %v423
        %v530 = vpack.c.b16 %v470, %v466
        %v531 = vpack.c.b16 %v471, %v467
        %v532 = vpack.c.b16 %v472, %v468
        %v533 = vpack.c.b16 %v473, %v469
        %v534 = vpack.c.b16 %v478, %v474
        %v535 = vpack.c.b16 %v479, %v475
        %v536 = vpack.c.b16 %v480, %v476
        %v537 = vpack.c.b16 %v481, %v477
        %v538 = vpack.c.b16 %v486, %v482
        %v539 = vpack.c.b16 %v487, %v483
        %v540 = vpack.c.b16 %v488, %v484
        %v541 = vpack.c.b16 %v489, %v485
        %v542 = vpack.c.b16 %v494, %v490
        %v543 = vpack.c.b16 %v495, %v491
        %v544 = vpack.c.b16 %v496, %v492
        %v545 = vpack.c.b16 %v497, %v493
        %v546 = vpack.c.b16 %v502, %v498
        %v547 = vpack.c.b16 %v503, %v499
        %v548 = vpack.c.b16 %v504, %v500
        %v549 = vpack.c.b16 %v505, %v501
        %v550 = vpack.c.b16 %v510, %v506
        %v551 = vpack.c.b16 %v511, %v507
        %v552 = vpack.c.b16 %v512, %v508
        %v553 = vpack.c.b16 %v513, %v509
        %v554 = vpack.c.b16 %v518, %v514
        %v555 = vpack.c.b16 %v519, %v515
        %v556 = vpack.c.b16 %v520, %v516
        %v557 = vpack.c.b16 %v521, %v517
        %v558 = vpack.c.b16 %v526, %v522
        %v559 = vpack.c.b16 %v527, %v523
        %v560 = vpack.c.b16 %v528, %v524
        %v561 = vpack.c.b16 %v529, %v525
        %594 = vmatpush.bf16.msra.mxu0 %v558
        %595 = vmatpush.bf16.msra.mxu0 %v554
        %596 = vmatpush.bf16.msra.mxu0 %v550
        %597 = vmatpush.bf16.msra.mxu0 %v546
        %598 = vmatpush.bf16.msra.mxu0 %v542
        %599 = vmatpush.bf16.msra.mxu0 %v538
        %600 = vmatpush.bf16.msra.mxu0 %v534
        %601 = vmatpush.bf16.msra.mxu0 %v530
        %602 = vmatmul.bf16.gmra.mxu0 %v391
        %v603 = vpop.f32.mrf.mxu0
        %v604 = vadd.f32 %v426, %v603
        %v605 = vpop.f32.mrf.mxu0
        %606 = vdwg.mxu0
        %607 = vmatpush.bf16.msra.mxu0 %v559
        %608 = vmatpush.bf16.msra.mxu0 %v555
        %609 = vmatpush.bf16.msra.mxu0 %v551
        %610 = vmatpush.bf16.msra.mxu0 %v547
        %611 = vmatpush.bf16.msra.mxu0 %v543
        %612 = vmatpush.bf16.msra.mxu0 %v539
        %613 = vmatpush.bf16.msra.mxu0 %v535
        %614 = vmatpush.bf16.msra.mxu0 %v531
        %615 = vmatmul.bf16.gmra.mxu0 %v391
        %v616 = vpop.f32.mrf.mxu0
        %v617 = vadd.f32 %v427, %v616
        %v618 = vpop.f32.mrf.mxu0
        %619 = vdwg.mxu0
        %620 = vmatpush.bf16.msra.mxu0 %v560
        %621 = vmatpush.bf16.msra.mxu0 %v556
        %622 = vmatpush.bf16.msra.mxu0 %v552
        %623 = vmatpush.bf16.msra.mxu0 %v548
        %624 = vmatpush.bf16.msra.mxu0 %v544
        %625 = vmatpush.bf16.msra.mxu0 %v540
        %626 = vmatpush.bf16.msra.mxu0 %v536
        %627 = vmatpush.bf16.msra.mxu0 %v532
        %628 = vmatmul.bf16.gmra.mxu0 %v391
        %v629 = vpop.f32.mrf.mxu0
        %v630 = vadd.f32 %v428, %v629
        %v631 = vpop.f32.mrf.mxu0
        %632 = vdwg.mxu0
        %633 = vmatpush.bf16.msra.mxu0 %v561
        %634 = vmatpush.bf16.msra.mxu0 %v557
        %635 = vmatpush.bf16.msra.mxu0 %v553
        %636 = vmatpush.bf16.msra.mxu0 %v549
        %637 = vmatpush.bf16.msra.mxu0 %v545
        %638 = vmatpush.bf16.msra.mxu0 %v541
        %639 = vmatpush.bf16.msra.mxu0 %v537
        %640 = vmatpush.bf16.msra.mxu0 %v533
        %641 = vmatmul.bf16.gmra.mxu0 %v391
        %v642 = vpop.f32.mrf.mxu0
        %v643 = vadd.f32 %v429, %v642
        %v644 = vpop.f32.mrf.mxu0
        %645 = vdwg.mxu0
        %v646 = vand.u32 2147483647, %v604
        %v647 = vand.u32 2147483647, %v617
        %v648 = vand.u32 2147483647, %v630
        %v649 = vand.u32 2147483647, %v643
        %v650 = vmul.f32 %v646, 0.70710677
        %v651 = vmul.f32 %v647, 0.70710677
        %v652 = vmul.f32 %v648, 0.70710677
        %v653 = vmul.f32 %v649, 0.70710677
        %v654 = vmul.f32 %v650, 0.3275911
        %v655 = vmul.f32 %v651, 0.3275911
        %v656 = vmul.f32 %v652, 0.3275911
        %v657 = vmul.f32 %v653, 0.3275911
        %v658 = vadd.f32 %v654, 1.0
        %v659 = vadd.f32 %v655, 1.0
        %v660 = vadd.f32 %v656, 1.0
        %v661 = vadd.f32 %v657, 1.0
        %v662 = vrcp.pop %v658
        %v663 = vrcp.pop %v659
        %v664 = vrcp.pop %v660
        %v665 = vrcp.pop %v661
        %v666 = vmul.f32 %v662, 1.0614054
        %v667 = vmul.f32 %v663, 1.0614054
        %v668 = vmul.f32 %v664, 1.0614054
        %v669 = vmul.f32 %v665, 1.0614054
        %v670 = vadd.f32 %v666, -1.4531521
        %v671 = vadd.f32 %v667, -1.4531521
        %v672 = vadd.f32 %v668, -1.4531521
        %v673 = vadd.f32 %v669, -1.4531521
        %v674 = vmul.f32 %v670, %v662
        %v675 = vmul.f32 %v671, %v663
        %v676 = vmul.f32 %v672, %v664
        %v677 = vmul.f32 %v673, %v665
        %v678 = vadd.f32 %v674, 1.4214138
        %v679 = vadd.f32 %v675, 1.4214138
        %v680 = vadd.f32 %v676, 1.4214138
        %v681 = vadd.f32 %v677, 1.4214138
        %v682 = vmul.f32 %v678, %v662
        %v683 = vmul.f32 %v679, %v663
        %v684 = vmul.f32 %v680, %v664
        %v685 = vmul.f32 %v681, %v665
        %v686 = vadd.f32 %v682, -0.28449672
        %v687 = vadd.f32 %v683, -0.28449672
        %v688 = vadd.f32 %v684, -0.28449672
        %v689 = vadd.f32 %v685, -0.28449672
        %v690 = vmul.f32 %v686, %v662
        %v691 = vmul.f32 %v687, %v663
        %v692 = vmul.f32 %v688, %v664
        %v693 = vmul.f32 %v689, %v665
        %v694 = vadd.f32 %v690, 0.2548296
        %v695 = vadd.f32 %v691, 0.2548296
        %v696 = vadd.f32 %v692, 0.2548296
        %v697 = vadd.f32 %v693, 0.2548296
        %v698 = vmul.f32 %v694, %v662
        %v699 = vmul.f32 %v695, %v663
        %v700 = vmul.f32 %v696, %v664
        %v701 = vmul.f32 %v697, %v665
        %v702 = vsub.f32 0.0, %v650
        %v703 = vsub.f32 0.0, %v651
        %v704 = vsub.f32 0.0, %v652
        %v705 = vsub.f32 0.0, %v653
        %v706 = vmul.f32 %v702, %v650
        %v707 = vmul.f32 %v703, %v651
        %v708 = vmul.f32 %v704, %v652
        %v709 = vmul.f32 %v705, %v653
        %v710 = vmul.f32 %v706, 1.442695
        %v711 = vpow.pop %v710
        %v712 = vmul.f32 %v707, 1.442695
        %v713 = vpow.pop %v712
        %v714 = vmul.f32 %v708, 1.442695
        %v715 = vpow.pop %v714
        %v716 = vmul.f32 %v709, 1.442695
        %v717 = vpow.pop %v716
        %v718 = vmul.f32 %v698, %v711
        %v719 = vmul.f32 %v699, %v713
        %v720 = vmul.f32 %v700, %v715
        %v721 = vmul.f32 %v701, %v717
        %v722 = vmax.f32 %v604, 0.0
        %v723 = vmax.f32 %v617, 0.0
        %v724 = vmax.f32 %v630, 0.0
        %v725 = vmax.f32 %v643, 0.0
        %v726 = vmul.f32 %v650, 0.70710677
        %v727 = vmul.f32 %v651, 0.70710677
        %v728 = vmul.f32 %v652, 0.70710677
        %v729 = vmul.f32 %v653, 0.70710677
        %v730 = vmul.f32 %v726, %v718
        %v731 = vmul.f32 %v727, %v719
        %v732 = vmul.f32 %v728, %v720
        %v733 = vmul.f32 %v729, %v721
        %v734 = vsub.f32 %v722, %v730
        %v735 = vsub.f32 %v723, %v731
        %v736 = vsub.f32 %v724, %v732
        %v737 = vsub.f32 %v725, %v733
        %v738 = vpack.c.bf16 %v734, %v734
        %v739 = vpack.c.bf16 %v735, %v735
        %v740 = vpack.c.bf16 %v736, %v736
        %v741 = vpack.c.bf16 %v737, %v737
        %v742 = vld [vmem:[#allocation10] sm:$0xf]
        %v743 = vld [vmem:[#allocation10 + $0x4] sm:$0xf]
        %v744 = vld [vmem:[#allocation10 + $0x8] sm:$0xf]
        %v745 = vld [vmem:[#allocation10 + $0xc] sm:$0xf]
        %v746 = vld [vmem:[#allocation10 + $0x10] sm:$0xf]
        %v747 = vld [vmem:[#allocation10 + $0x14] sm:$0xf]
        %v748 = vld [vmem:[#allocation10 + $0x18] sm:$0xf]
        %v749 = vld [vmem:[#allocation10 + $0x1c] sm:$0xf]
        %v750 = vld [vmem:[#allocation10 + $0x20] sm:$0xf]
        %v751 = vld [vmem:[#allocation10 + $0x24] sm:$0xf]
        %v752 = vld [vmem:[#allocation10 + $0x28] sm:$0xf]
        %v753 = vld [vmem:[#allocation10 + $0x2c] sm:$0xf]
        %v754 = vld [vmem:[#allocation10 + $0x30] sm:$0xf]
        %v755 = vld [vmem:[#allocation10 + $0x34] sm:$0xf]
        %v756 = vld [vmem:[#allocation10 + $0x38] sm:$0xf]
        %v757 = vld [vmem:[#allocation10 + $0x3c] sm:$0xf]
        %v758 = vld [vmem:[#allocation10 + $0x40] sm:$0xf]
        %v759 = vld [vmem:[#allocation10 + $0x44] sm:$0xf]
        %v760 = vld [vmem:[#allocation10 + $0x48] sm:$0xf]
        %v761 = vld [vmem:[#allocation10 + $0x4c] sm:$0xf]
        %v762 = vld [vmem:[#allocation10 + $0x50] sm:$0xf]
        %v763 = vld [vmem:[#allocation10 + $0x54] sm:$0xf]
        %v764 = vld [vmem:[#allocation10 + $0x58] sm:$0xf]
        %v765 = vld [vmem:[#allocation10 + $0x5c] sm:$0xf]
        %v766 = vld [vmem:[#allocation10 + $0x60] sm:$0xf]
        %v767 = vld [vmem:[#allocation10 + $0x64] sm:$0xf]
        %v768 = vld [vmem:[#allocation10 + $0x68] sm:$0xf]
        %v769 = vld [vmem:[#allocation10 + $0x6c] sm:$0xf]
        %v770 = vld [vmem:[#allocation10 + $0x70] sm:$0xf]
        %v771 = vld [vmem:[#allocation10 + $0x74] sm:$0xf]
        %v772 = vld [vmem:[#allocation10 + $0x78] sm:$0xf]
        %v773 = vld [vmem:[#allocation10 + $0x7c] sm:$0xf]
        %v774 = vld [vmem:[#allocation10 + $0x80] sm:$0xf]
        %v775 = vld [vmem:[#allocation10 + $0x84] sm:$0xf]
        %v776 = vld [vmem:[#allocation10 + $0x88] sm:$0xf]
        %v777 = vld [vmem:[#allocation10 + $0x8c] sm:$0xf]
        %v778 = vld [vmem:[#allocation10 + $0x90] sm:$0xf]
        %v779 = vld [vmem:[#allocation10 + $0x94] sm:$0xf]
        %v780 = vld [vmem:[#allocation10 + $0x98] sm:$0xf]
        %v781 = vld [vmem:[#allocation10 + $0x9c] sm:$0xf]
        %v782 = vld [vmem:[#allocation10 + $0xa0] sm:$0xf]
        %v783 = vld [vmem:[#allocation10 + $0xa4] sm:$0xf]
        %v784 = vld [vmem:[#allocation10 + $0xa8] sm:$0xf]
        %v785 = vld [vmem:[#allocation10 + $0xac] sm:$0xf]
        %v786 = vld [vmem:[#allocation10 + $0xb0] sm:$0xf]
        %v787 = vld [vmem:[#allocation10 + $0xb4] sm:$0xf]
        %v788 = vld [vmem:[#allocation10 + $0xb8] sm:$0xf]
        %v789 = vld [vmem:[#allocation10 + $0xbc] sm:$0xf]
        %v790 = vld [vmem:[#allocation10 + $0xc0] sm:$0xf]
        %v791 = vld [vmem:[#allocation10 + $0xc4] sm:$0xf]
        %v792 = vld [vmem:[#allocation10 + $0xc8] sm:$0xf]
        %v793 = vld [vmem:[#allocation10 + $0xcc] sm:$0xf]
        %v794 = vld [vmem:[#allocation10 + $0xd0] sm:$0xf]
        %v795 = vld [vmem:[#allocation10 + $0xd4] sm:$0xf]
        %v796 = vld [vmem:[#allocation10 + $0xd8] sm:$0xf]
        %v797 = vld [vmem:[#allocation10 + $0xdc] sm:$0xf]
        %v798 = vld [vmem:[#allocation10 + $0xe0] sm:$0xf]
        %v799 = vld [vmem:[#allocation10 + $0xe4] sm:$0xf]
        %v800 = vld [vmem:[#allocation10 + $0xe8] sm:$0xf]
        %v801 = vld [vmem:[#allocation10 + $0xec] sm:$0xf]
        %v802 = vld [vmem:[#allocation10 + $0xf0] sm:$0xf]
        %v803 = vld [vmem:[#allocation10 + $0xf4] sm:$0xf]
        %v804 = vld [vmem:[#allocation10 + $0xf8] sm:$0xf]
        %v805 = vld [vmem:[#allocation10 + $0xfc] sm:$0xf]
        %v806 = vld [vmem:[%s6] sm:$0x1]
        %v808 = vperm.slane %v806, 0
        %v874 = vunpack.c.l.b16 %v742
        %v875 = vunpack.c.l.b16 %v743
        %v876 = vunpack.c.l.b16 %v744
        %v877 = vunpack.c.l.b16 %v745
        %v878 = vunpack.c.l.b16 %v746
        %v879 = vunpack.c.l.b16 %v747
        %v880 = vunpack.c.l.b16 %v748
        %v881 = vunpack.c.l.b16 %v749
        %v882 = vunpack.c.l.b16 %v750
        %v883 = vunpack.c.l.b16 %v751
        %v884 = vunpack.c.l.b16 %v752
        %v885 = vunpack.c.l.b16 %v753
        %v886 = vunpack.c.l.b16 %v754
        %v887 = vunpack.c.l.b16 %v755
        %v888 = vunpack.c.l.b16 %v756
        %v889 = vunpack.c.l.b16 %v757
        %v890 = vunpack.c.l.b16 %v758
        %v891 = vunpack.c.l.b16 %v759
        %v892 = vunpack.c.l.b16 %v760
        %v893 = vunpack.c.l.b16 %v761
        %v894 = vunpack.c.l.b16 %v762
        %v895 = vunpack.c.l.b16 %v763
        %v896 = vunpack.c.l.b16 %v764
        %v897 = vunpack.c.l.b16 %v765
        %v898 = vunpack.c.l.b16 %v766
        %v899 = vunpack.c.l.b16 %v767
        %v900 = vunpack.c.l.b16 %v768
        %v901 = vunpack.c.l.b16 %v769
        %v902 = vunpack.c.l.b16 %v770
        %v903 = vunpack.c.l.b16 %v771
        %v904 = vunpack.c.l.b16 %v772
        %v905 = vunpack.c.l.b16 %v773
        %v906 = vunpack.c.l.b16 %v774
        %v907 = vunpack.c.l.b16 %v775
        %v908 = vunpack.c.l.b16 %v776
        %v909 = vunpack.c.l.b16 %v777
        %v910 = vunpack.c.l.b16 %v778
        %v911 = vunpack.c.l.b16 %v779
        %v912 = vunpack.c.l.b16 %v780
        %v913 = vunpack.c.l.b16 %v781
        %v914 = vunpack.c.l.b16 %v782
        %v915 = vunpack.c.l.b16 %v783
        %v916 = vunpack.c.l.b16 %v784
        %v917 = vunpack.c.l.b16 %v785
        %v918 = vunpack.c.l.b16 %v786
        %v919 = vunpack.c.l.b16 %v787
        %v920 = vunpack.c.l.b16 %v788
        %v921 = vunpack.c.l.b16 %v789
        %v922 = vunpack.c.l.b16 %v790
        %v923 = vunpack.c.l.b16 %v791
        %v924 = vunpack.c.l.b16 %v792
        %v925 = vunpack.c.l.b16 %v793
        %v926 = vunpack.c.l.b16 %v794
        %v927 = vunpack.c.l.b16 %v795
        %v928 = vunpack.c.l.b16 %v796
        %v929 = vunpack.c.l.b16 %v797
        %v930 = vunpack.c.l.b16 %v798
        %v931 = vunpack.c.l.b16 %v799
        %v932 = vunpack.c.l.b16 %v800
        %v933 = vunpack.c.l.b16 %v801
        %v934 = vunpack.c.l.b16 %v802
        %v935 = vunpack.c.l.b16 %v803
        %v936 = vunpack.c.l.b16 %v804
        %v937 = vunpack.c.l.b16 %v805
        %v938 = vpack.c.b16 %v875, %v874
        %v939 = vpack.c.b16 %v877, %v876
        %v940 = vpack.c.b16 %v879, %v878
        %v941 = vpack.c.b16 %v881, %v880
        %v942 = vpack.c.b16 %v883, %v882
        %v943 = vpack.c.b16 %v885, %v884
        %v944 = vpack.c.b16 %v887, %v886
        %v945 = vpack.c.b16 %v889, %v888
        %v946 = vpack.c.b16 %v891, %v890
        %v947 = vpack.c.b16 %v893, %v892
        %v948 = vpack.c.b16 %v895, %v894
        %v949 = vpack.c.b16 %v897, %v896
        %v950 = vpack.c.b16 %v899, %v898
        %v951 = vpack.c.b16 %v901, %v900
        %v952 = vpack.c.b16 %v903, %v902
        %v953 = vpack.c.b16 %v905, %v904
        %v954 = vpack.c.b16 %v907, %v906
        %v955 = vpack.c.b16 %v909, %v908
        %v956 = vpack.c.b16 %v911, %v910
        %v957 = vpack.c.b16 %v913, %v912
        %v958 = vpack.c.b16 %v915, %v914
        %v959 = vpack.c.b16 %v917, %v916
        %v960 = vpack.c.b16 %v919, %v918
        %v961 = vpack.c.b16 %v921, %v920
        %v962 = vpack.c.b16 %v923, %v922
        %v963 = vpack.c.b16 %v925, %v924
        %v964 = vpack.c.b16 %v927, %v926
        %v965 = vpack.c.b16 %v929, %v928
        %v966 = vpack.c.b16 %v931, %v930
        %v967 = vpack.c.b16 %v933, %v932
        %v968 = vpack.c.b16 %v935, %v934
        %v969 = vpack.c.b16 %v937, %v936
        %1002 = vmatpush.bf16.msra.mxu0 %v945
        %1003 = vmatpush.bf16.msra.mxu0 %v944
        %1004 = vmatpush.bf16.msra.mxu0 %v943
        %1005 = vmatpush.bf16.msra.mxu0 %v942
        %1006 = vmatpush.bf16.msra.mxu0 %v941
        %1007 = vmatpush.bf16.msra.mxu0 %v940
        %1008 = vmatpush.bf16.msra.mxu0 %v939
        %1009 = vmatpush.bf16.msra.mxu0 %v938
        %1010 = vmatmul.bf16.gmra.mxu0 %v738
        %v1011 = vpop.f32.mrf.mxu0
        %v1012 = vadd.f32 %v808, %v1011
        %v1013 = vpop.f32.mrf.mxu0
        %1014 = vdwg.mxu0
        %1015 = vmatpush.bf16.msra.mxu0 %v953
        %1016 = vmatpush.bf16.msra.mxu0 %v952
        %1017 = vmatpush.bf16.msra.mxu0 %v951
        %1018 = vmatpush.bf16.msra.mxu0 %v950
        %1019 = vmatpush.bf16.msra.mxu0 %v949
        %1020 = vmatpush.bf16.msra.mxu0 %v948
        %1021 = vmatpush.bf16.msra.mxu0 %v947
        %1022 = vmatpush.bf16.msra.mxu0 %v946
        %1023 = vmatmul.bf16.gmra.mxu0 %v739
        %v1024 = vpop.f32.mrf.mxu0
        %v1025 = vadd.f32 %v1012, %v1024
        %v1026 = vpop.f32.mrf.mxu0
        %1027 = vdwg.mxu0
        %1028 = vmatpush.bf16.msra.mxu0 %v961
        %1029 = vmatpush.bf16.msra.mxu0 %v960
        %1030 = vmatpush.bf16.msra.mxu0 %v959
        %1031 = vmatpush.bf16.msra.mxu0 %v958
        %1032 = vmatpush.bf16.msra.mxu0 %v957
        %1033 = vmatpush.bf16.msra.mxu0 %v956
        %1034 = vmatpush.bf16.msra.mxu0 %v955
        %1035 = vmatpush.bf16.msra.mxu0 %v954
        %1036 = vmatmul.bf16.gmra.mxu0 %v740
        %v1037 = vpop.f32.mrf.mxu0
        %v1038 = vadd.f32 %v1025, %v1037
        %v1039 = vpop.f32.mrf.mxu0
        %1040 = vdwg.mxu0
        %1041 = vmatpush.bf16.msra.mxu0 %v969
        %1042 = vmatpush.bf16.msra.mxu0 %v968
        %1043 = vmatpush.bf16.msra.mxu0 %v967
        %1044 = vmatpush.bf16.msra.mxu0 %v966
        %1045 = vmatpush.bf16.msra.mxu0 %v965
        %1046 = vmatpush.bf16.msra.mxu0 %v964
        %1047 = vmatpush.bf16.msra.mxu0 %v963
        %1048 = vmatpush.bf16.msra.mxu0 %v962
        %1049 = vmatmul.bf16.gmra.mxu0 %v741
        %v1050 = vpop.f32.mrf.mxu0
        %v1051 = vadd.f32 %v1038, %v1050
        %v1052 = vpop.f32.mrf.mxu0
        %1053 = vdwg.mxu0
        %1054 = vst [vmem:[%s357] sm:$0xff] %v1051
        %s1055 = sand.u32 %s186, 1
        %s1056 = scalar_lea.sflag [#allocation4], %s1055
        %s1057 = sand.u32 %s186, 1
        %s1058 = smul.addr %s1057, 8
        %s1059 = scalar_lea.vmem [#allocation11], %s1058
        // Predicated region
        $region69: #{tpu_custom_call.1} parent=47 // pred_check
          %p1060 = pneg %p196
        $region70: #{tpu_custom_call.1} parent=47 // pred_check_branch
          %1062 = sbr.rel (%p1060) target = $region72
        $region71: #{tpu_custom_call.1} parent=47 // pred_region
          %1064 = vsyncadd %s1056, 0
          %s1065 = smul.addr %s26, 8
          %s1066 = scalar_lea.hbm %s7, %s1065
          %s1068 = sshll.u32 %s1059, 4
          %s1069 = int_to_ptr.vmem [resolvable:$true] %s1068
          %s1070 = sshll.u32 %s1066, 4
          %s1071 = int_to_ptr.hbm [resolvable:$true] %s1070
          %1073 = dma.vmem_to_hbm [thread:$0]  %s1069, 128, %s1071, %s1056
        $region72: #{tpu_custom_call.1} parent=47 // pred_fallthru
          _
      $region48: #{tpu_custom_call.1} parent=5 // pred_fallthru
        _
      %p1074 = scmp.le.s32.totalorder 2, %s21
      // Predicated region
      $region73: #{tpu_custom_call.1} parent=5 // pred_check
        %p1075 = pneg %p1074
      $region74: #{tpu_custom_call.1} parent=5 // pred_check_branch
        %1077 = sbr.rel (%p1075) target = $region76
      $region75: #{tpu_custom_call.1} parent=5 // pred_region
        %s1078 = ssub.s32 %s21, 2
        // Predicated region
        $region77: #{tpu_custom_call.1} parent=75 // pred_check
          %p1079 = pneg %p202
        $region78: #{tpu_custom_call.1} parent=75 // pred_check_branch
          %1081 = sbr.rel (%p1079) target = $region80
        $region79: #{tpu_custom_call.1} parent=75 // pred_region
          %s1082 = sand.u32 %s187, 1
          %s1083 = scalar_lea.sflag [#allocation4], %s1082
          %s1084 = sand.u32 %s187, 1
          %s1085 = smul.addr %s1084, 8
          %s1086 = scalar_lea.vmem [#allocation11], %s1085
          %1088 = dma.done %s1083, 128
        $region80: #{tpu_custom_call.1} parent=75 // pred_fallthru
          _
      $region76: #{tpu_custom_call.1} parent=5 // pred_fallthru
        _
    $region6: #{tpu_custom_call.1} parent=1 // loop_footer
      %s25 = sadd.s32 1, %s21
    $region7: #{tpu_custom_call.1} parent=1 // loop_footer_branch
      %20 = sbr.rel target = $region3
    $region8: #{tpu_custom_call.1} parent=1 // loop_exit
      _
    %1089 = vsyncpa [#allocation3], 1
    %s1090 = scalar_lea.sflag [#allocation3], 1
    %1091 = vsyncpa %s1090, 1
    %1092 = vsyncpa [#allocation6], 1
    %1093 = vsyncpa [#allocation9], 1
    %1094 = vsyncpa [#allocation4], 1
    %s1095 = scalar_lea.sflag [#allocation4], 1
    %1096 = vsyncpa %s1095, 1

// kernel: tpu_custom_call.1
$region0: #{tpu_custom_call.1}
  #allocation0 [shape = 'u32[]', space=smem, size = 0x4, offset = 0x4, fixed_abs, tag = 'smem constant byte address 0x4 - core index']
  #allocation1 [shape = 'u32[72,128]{1,0:T(1,128)}', space=vmem, size = 0x9000, scoped, tag = 'internal scratch']
  %s0 = inlined_call_operand.hbm [shape: f32[16,128], index: 0, kind: input, shape index: {}]
  %s1 = inlined_call_operand.hbm [shape: f32[1,128], index: 1, kind: input, shape index: {}]
  %s2 = inlined_call_operand.vmem [shape: f32[1,128], index: 2, kind: input, shape index: {}]
  %s3 = inlined_call_operand.hbm [shape: bf16[128,512], index: 3, kind: input, shape index: {}]
  %s4 = inlined_call_operand.hbm [shape: f32[1,512], index: 4, kind: input, shape index: {}]
  %s5 = inlined_call_operand.hbm [shape: bf16[512,128], index: 5, kind: input, shape index: {}]
  %s6 = inlined_call_operand.vmem [shape: f32[1,128], index: 6, kind: input, shape index: {}]
  %s7 = inlined_call_operand.hbm [shape: f32[16,128], index: 7, kind: output, shape index: {}]
  %s8 = sld [smem:[#allocation0]]
  $region81: #{tpu_custom_call.1} parent=0
    _
  %s10 = ssub.s32 1, %s8
  %s11 = scalar_select 0, %s10, %s8
  $region1: #{tpu_custom_call.1} parent=0
    #allocation2 [shape = 'u8[8192]{0}', space=vmem, size = 0x2000, scoped, tag = 'input window, operand 0']
    #allocation3 [shape = 's32[2]{0}', space=sflag, size = 0x8, scoped, tag = 'scoped memory for tpu_custom_call.1']
    #allocation4 [shape = 's32[2]{0}', space=sflag, size = 0x8, scoped, tag = 'scoped memory for tpu_custom_call.1']
    #allocation5 [shape = 'u8[512]{0}', space=vmem, size = 0x400, scoped, tag = 'input window, operand 1, single buffered']
    #allocation6 [shape = 's32[1]{0}', space=sflag, size = 0x4, scoped, tag = 'scoped memory for tpu_custom_call.1']
    #allocation7 [shape = 'u8[131072]{0}', space=vmem, size = 0x20000, scoped, tag = 'input window, operand 3, single buffered']
    #allocation8 [shape = 'u8[2048]{0}', space=vmem, size = 0x800, scoped, tag = 'input window, operand 4, single buffered']
    #allocation9 [shape = 's32[1]{0}', space=sflag, size = 0x4, scoped, tag = 'scoped memory for tpu_custom_call.1']
    #allocation10 [shape = 'u8[131072]{0}', space=vmem, size = 0x20000, scoped, tag = 'input window, operand 5, single buffered']
    #allocation11 [shape = 'u8[8192]{0}', space=vmem, size = 0x2000, scoped, tag = 'output window, operand 0']
    %12 = vsyncpa [#allocation3], 0
    %s13 = scalar_lea.sflag [#allocation3], 1
    %14 = vsyncpa %s13, 0
    %15 = vsyncpa [#allocation6], 0
    %16 = vsyncpa [#allocation9], 0
    %17 = vsyncpa [#allocation4], 0
    %s18 = scalar_lea.sflag [#allocation4], 1
    %19 = vsyncpa %s18, 0
    loop: start=0, step=1, limit=4
    $region2: #{tpu_custom_call.1} parent=1 // loop_pre_header
      _
    $region3: #{tpu_custom_call.1} parent=1 // loop_header
      %s21 = sphi 0, %s25
      %p22 = scmp.ge.s32.totalorder %s21, 4
      %s31 = sphi 0, %s33
      %s34 = sphi 0, %s31
      %s35 = sphi 0, %s34
      %s51 = sphi 0, %s35
      %s55 = sphi 0, %s55
      %s57 = sphi 0, %s55
      %s58 = sphi 0, %s57
      %s72 = sphi 0, %s58
      %s76 = sphi 0, %s76
      %s78 = sphi 0, %s76
      %s79 = sphi 0, %s78
      %s93 = sphi 0, %s79
      %s97 = sphi 0, %s97
      %s99 = sphi 0, %s97
      %s100 = sphi 0, %s99
      %s114 = sphi 0, %s100
      %s118 = sphi 0, %s118
      %s120 = sphi 0, %s118
      %s121 = sphi 0, %s120
      %s135 = sphi 0, %s121
      %s139 = sphi 0, %s139
      %s141 = sphi 0, %s139
      %s142 = sphi 0, %s141
      %s156 = sphi 0, %s142
      %s160 = sphi 0, %s160
      %s162 = sphi 0, %s160
      %s163 = sphi 0, %s162
      %s177 = sphi 0, %s163
      %s183 = sphi 0, %s185
      %s186 = sphi 0, %s183
      %s187 = sphi 0, %s186
      %s203 = sphi 0, %s187
    $region4: #{tpu_custom_call.1} parent=1 // loop_header_branch
      %24 = sbr.rel (%p22) target = $region8
    $region5: #{tpu_custom_call.1} parent=1 // loop_body
      %s26 = ssub.s32 %s21, 1
      %s27 = ssub.s32 %s21, 2
      %s28 = sadd.s32 %s21, 1
      %s29 = ssub.s32 %s21, %s28
      %p30 = scmp.eq.s32.totalorder %s29, 0
      %s32 = sadd.s32 %s31, 1
      %s33 = scalar_select %p30, %s31, %s32
      %p36 = pneg %p30
      %p37 = scmp.eq.s32.totalorder %s21, 1
      %p38 = por %p36, %p37
      %p39 = scmp.ne.s32.totalorder %s31, %s34
      %p40 = scmp.eq.s32.totalorder %s21, 0
      %p41 = por %p39, %p40
      %p42 = scmp.ne.s32.totalorder %s31, %s34
      %p43 = scmp.eq.s32.totalorder %s26, 1
      %p44 = por %p42, %p43
      %p45 = scmp.ne.s32.totalorder %s34, %s35
      %p46 = scmp.eq.s32.totalorder %s26, 0
      %p47 = por %p45, %p46
      %p48 = scmp.ne.s32.totalorder %s34, %s35
      %p49 = scmp.eq.s32.totalorder %s27, 1
      %p50 = por %p48, %p49
      %p52 = scmp.ne.s32.totalorder %s35, %s51
      %p53 = scmp.eq.s32.totalorder %s27, 0
      %p54 = por %p52, %p53
      %s56 = sadd.s32 %s55, 1
      %p59 = scmp.eq.s32.totalorder %s21, 1
      %p60 = scmp.ne.s32.totalorder %s55, %s57
      %p61 = scmp.eq.s32.totalorder %s21, 0
      %p62 = por %p60, %p61
      %p63 = scmp.ne.s32.totalorder %s55, %s57
      %p64 = scmp.eq.s32.totalorder %s26, 1
      %p65 = por %p63, %p64
      %p66 = scmp.ne.s32.totalorder %s57, %s58
      %p67 = scmp.eq.s32.totalorder %s26, 0
      %p68 = por %p66, %p67
      %p69 = scmp.ne.s32.totalorder %s57, %s58
      %p70 = scmp.eq.s32.totalorder %s27, 1
      %p71 = por %p69, %p70
      %p73 = scmp.ne.s32.totalorder %s58, %s72
      %p74 = scmp.eq.s32.totalorder %s27, 0
      %p75 = por %p73, %p74
      %s77 = sadd.s32 %s76, 1
      %p80 = scmp.eq.s32.totalorder %s21, 1
      %p81 = scmp.ne.s32.totalorder %s76, %s78
      %p82 = scmp.eq.s32.totalorder %s21, 0
      %p83 = por %p81, %p82
      %p84 = scmp.ne.s32.totalorder %s76, %s78
      %p85 = scmp.eq.s32.totalorder %s26, 1
      %p86 = por %p84, %p85
      %p87 = scmp.ne.s32.totalorder %s78, %s79
      %p88 = scmp.eq.s32.totalorder %s26, 0
      %p89 = por %p87, %p88
      %p90 = scmp.ne.s32.totalorder %s78, %s79
      %p91 = scmp.eq.s32.totalorder %s27, 1
      %p92 = por %p90, %p91
      %p94 = scmp.ne.s32.totalorder %s79, %s93
      %p95 = scmp.eq.s32.totalorder %s27, 0
      %p96 = por %p94, %p95
      %s98 = sadd.s32 %s97, 1
      %p101 = scmp.eq.s32.totalorder %s21, 1
      %p102 = scmp.ne.s32.totalorder %s97, %s99
      %p103 = scmp.eq.s32.totalorder %s21, 0
      %p104 = por %p102, %p103
      %p105 = scmp.ne.s32.totalorder %s97, %s99
      %p106 = scmp.eq.s32.totalorder %s26, 1
      %p107 = por %p105, %p106
      %p108 = scmp.ne.s32.totalorder %s99, %s100
      %p109 = scmp.eq.s32.totalorder %s26, 0
      %p110 = por %p108, %p109
      %p111 = scmp.ne.s32.totalorder %s99, %s100
      %p112 = scmp.eq.s32.totalorder %s27, 1
      %p113 = por %p111, %p112
      %p115 = scmp.ne.s32.totalorder %s100, %s114
      %p116 = scmp.eq.s32.totalorder %s27, 0
      %p117 = por %p115, %p116
      %s119 = sadd.s32 %s118, 1
      %p122 = scmp.eq.s32.totalorder %s21, 1
      %p123 = scmp.ne.s32.totalorder %s118, %s120
      %p124 = scmp.eq.s32.totalorder %s21, 0
      %p125 = por %p123, %p124
      %p126 = scmp.ne.s32.totalorder %s118, %s120
      %p127 = scmp.eq.s32.totalorder %s26, 1
      %p128 = por %p126, %p127
      %p129 = scmp.ne.s32.totalorder %s120, %s121
      %p130 = scmp.eq.s32.totalorder %s26, 0
      %p131 = por %p129, %p130
      %p132 = scmp.ne.s32.totalorder %s120, %s121
      %p133 = scmp.eq.s32.totalorder %s27, 1
      %p134 = por %p132, %p133
      %p136 = scmp.ne.s32.totalorder %s121, %s135
      %p137 = scmp.eq.s32.totalorder %s27, 0
      %p138 = por %p136, %p137
      %s140 = sadd.s32 %s139, 1
      %p143 = scmp.eq.s32.totalorder %s21, 1
      %p144 = scmp.ne.s32.totalorder %s139, %s141
      %p145 = scmp.eq.s32.totalorder %s21, 0
      %p146 = por %p144, %p145
      %p147 = scmp.ne.s32.totalorder %s139, %s141
      %p148 = scmp.eq.s32.totalorder %s26, 1
      %p149 = por %p147, %p148
      %p150 = scmp.ne.s32.totalorder %s141, %s142
      %p151 = scmp.eq.s32.totalorder %s26, 0
      %p152 = por %p150, %p151
      %p153 = scmp.ne.s32.totalorder %s141, %s142
      %p154 = scmp.eq.s32.totalorder %s27, 1
      %p155 = por %p153, %p154
      %p157 = scmp.ne.s32.totalorder %s142, %s156
      %p158 = scmp.eq.s32.totalorder %s27, 0
      %p159 = por %p157, %p158
      %s161 = sadd.s32 %s160, 1
      %p164 = scmp.eq.s32.totalorder %s21, 1
      %p165 = scmp.ne.s32.totalorder %s160, %s162
      %p166 = scmp.eq.s32.totalorder %s21, 0
      %p167 = por %p165, %p166
      %p168 = scmp.ne.s32.totalorder %s160, %s162
      %p169 = scmp.eq.s32.totalorder %s26, 1
      %p170 = por %p168, %p169
      %p171 = scmp.ne.s32.totalorder %s162, %s163
      %p172 = scmp.eq.s32.totalorder %s26, 0
      %p173 = por %p171, %p172
      %p174 = scmp.ne.s32.totalorder %s162, %s163
      %p175 = scmp.eq.s32.totalorder %s27, 1
      %p176 = por %p174, %p175
      %p178 = scmp.ne.s32.totalorder %s163, %s177
      %p179 = scmp.eq.s32.totalorder %s27, 0
      %p180 = por %p178, %p179
      %s181 = ssub.s32 %s21, %s28
      %p182 = scmp.eq.s32.totalorder %s181, 0
      %s184 = sadd.s32 %s183, 1
      %s185 = scalar_select %p182, %s183, %s184
      %p188 = pneg %p182
      %p189 = scmp.eq.s32.totalorder %s21, 1
      %p190 = por %p188, %p189
      %p191 = scmp.ne.s32.totalorder %s183, %s186
      %p192 = scmp.eq.s32.totalorder %s21, 0
      %p193 = por %p191, %p192
      %p194 = scmp.ne.s32.totalorder %s183, %s186
      %p195 = scmp.eq.s32.totalorder %s26, 1
      %p196 = por %p194, %p195
      %p197 = scmp.ne.s32.totalorder %s186, %s187
      %p198 = scmp.eq.s32.totalorder %s26, 0
      %p199 = por %p197, %p198
      %p200 = scmp.ne.s32.totalorder %s186, %s187
      %p201 = scmp.eq.s32.totalorder %s27, 1
      %p202 = por %p200, %p201
      %p204 = scmp.ne.s32.totalorder %s187, %s203
      %p205 = scmp.eq.s32.totalorder %s27, 0
      %p206 = por %p204, %p205
      %p207 = scmp.le.s32.totalorder 1, %s21
      %p208 = scmp.lt.s32.totalorder %s21, 3
      %p209 = pnand %p207, %p208
      %p210 = pneg %p209
      // Predicated region
      $region9: #{tpu_custom_call.1} parent=5 // pred_check
        _
      $region10: #{tpu_custom_call.1} parent=5 // pred_check_branch
        %212 = sbr.rel (%p209) target = $region12
      $region11: #{tpu_custom_call.1} parent=5 // pred_region
        %s213 = ssub.s32 %s21, 1
        // Predicated region
        $region13: #{tpu_custom_call.1} parent=11 // pred_check
          %p214 = pneg %p68
        $region14: #{tpu_custom_call.1} parent=11 // pred_check_branch
          %216 = sbr.rel (%p214) target = $region16
        $region15: #{tpu_custom_call.1} parent=11 // pred_region
          %218 = vsyncadd [#allocation6], 0
          %s220 = sshll.u32 %s1, 4
          %s221 = int_to_ptr.hbm [resolvable:$true] %s220
          %s222 = sshll.u32 [#allocation5], 4
          %s223 = int_to_ptr.vmem [resolvable:$true] %s222
          %225 = dma.hbm_to_vmem [thread:$0]  %s221, 16, %s223, [#allocation6]
        $region16: #{tpu_custom_call.1} parent=11 // pred_fallthru
          _
        // Predicated region
        $region17: #{tpu_custom_call.1} parent=11 // pred_check
          %p226 = pneg %p89
        $region18: #{tpu_custom_call.1} parent=11 // pred_check_branch
          %228 = sbr.rel (%p226) target = $region20
        $region19: #{tpu_custom_call.1} parent=11 // pred_region
          _
        $region20: #{tpu_custom_call.1} parent=11 // pred_fallthru
          _
        // Predicated region
        $region21: #{tpu_custom_call.1} parent=11 // pred_check
          %p229 = pneg %p110
        $region22: #{tpu_custom_call.1} parent=11 // pred_check_branch
          %231 = sbr.rel (%p229) target = $region24
        $region23: #{tpu_custom_call.1} parent=11 // pred_region
          %233 = vsyncadd [#allocation6], 0
          %s234 = sshll.u32 %s3, 4
          %s235 = int_to_ptr.hbm [resolvable:$true] %s234
          %s236 = sshll.u32 [#allocation7], 4
          %s237 = int_to_ptr.vmem [resolvable:$true] %s236
          %242 = dma.hbm_to_vmem [thread:$0]  %s235, 4096, %s237, [#allocation6], 256, 256, 16
        $region24: #{tpu_custom_call.1} parent=11 // pred_fallthru
          _
        // Predicated region
        $region25: #{tpu_custom_call.1} parent=11 // pred_check
          %p243 = pneg %p131
        $region26: #{tpu_custom_call.1} parent=11 // pred_check_branch
          %245 = sbr.rel (%p243) target = $region28
        $region27: #{tpu_custom_call.1} parent=11 // pred_region
          %247 = vsyncadd [#allocation9], 0
          %s249 = sshll.u32 %s4, 4
          %s250 = int_to_ptr.hbm [resolvable:$true] %s249
          %s251 = sshll.u32 [#allocation8], 4
          %s252 = int_to_ptr.vmem [resolvable:$true] %s251
          %254 = dma.hbm_to_vmem [thread:$0]  %s250, 64, %s252, [#allocation9]
        $region28: #{tpu_custom_call.1} parent=11 // pred_fallthru
          _
        // Predicated region
        $region29: #{tpu_custom_call.1} parent=11 // pred_check
          %p255 = pneg %p152
        $region30: #{tpu_custom_call.1} parent=11 // pred_check_branch
          %257 = sbr.rel (%p255) target = $region32
        $region31: #{tpu_custom_call.1} parent=11 // pred_region
          %259 = vsyncadd [#allocation9], 0
          %s260 = sshll.u32 %s5, 4
          %s261 = int_to_ptr.hbm [resolvable:$true] %s260
          %s262 = sshll.u32 [#allocation10], 4
          %s263 = int_to_ptr.vmem [resolvable:$true] %s262
          %268 = dma.hbm_to_vmem [thread:$0]  %s261, 4096, %s263, [#allocation9], 64, 64, 4
        $region32: #{tpu_custom_call.1} parent=11 // pred_fallthru
          _
        // Predicated region
        $region33: #{tpu_custom_call.1} parent=11 // pred_check
          %p269 = pneg %p173
        $region34: #{tpu_custom_call.1} parent=11 // pred_check_branch
          %271 = sbr.rel (%p269) target = $region36
        $region35: #{tpu_custom_call.1} parent=11 // pred_region
          _
        $region36: #{tpu_custom_call.1} parent=11 // pred_fallthru
          _
      $region12: #{tpu_custom_call.1} parent=5 // pred_fallthru
        _
      %p272 = scmp.lt.s32.totalorder %s21, 2
      // Predicated region
      $region37: #{tpu_custom_call.1} parent=5 // pred_check
        %p273 = pneg %p272
      $region38: #{tpu_custom_call.1} parent=5 // pred_check_branch
        %275 = sbr.rel (%p273) target = $region40
      $region39: #{tpu_custom_call.1} parent=5 // pred_region
        // Predicated region
        $region41: #{tpu_custom_call.1} parent=39 // pred_check
          %p276 = pneg %p41
        $region42: #{tpu_custom_call.1} parent=39 // pred_check_branch
          %278 = sbr.rel (%p276) target = $region44
        $region43: #{tpu_custom_call.1} parent=39 // pred_region
          %s279 = sand.u32 %s31, 1
          %s280 = scalar_lea.sflag [#allocation3], %s279
          %s281 = sand.u32 %s31, 1
          %s282 = smul.addr %s281, 8
          %s283 = scalar_lea.vmem [#allocation2], %s282
          %285 = vsyncadd %s280, 0
          %s286 = smul.addr %s21, 8
          %s287 = scalar_lea.hbm %s0, %s286
          %s289 = sshll.u32 %s287, 4
          %s290 = int_to_ptr.hbm [resolvable:$true] %s289
          %s291 = sshll.u32 %s283, 4
          %s292 = int_to_ptr.vmem [resolvable:$true] %s291
          %294 = dma.hbm_to_vmem [thread:$0]  %s290, 128, %s292, %s280
        $region44: #{tpu_custom_call.1} parent=39 // pred_fallthru
          _
      $region40: #{tpu_custom_call.1} parent=5 // pred_fallthru
        _
      %p295 = scmp.le.s32.totalorder 1, %s21
      %p296 = scmp.lt.s32.totalorder %s21, 3
      %p297 = pnand %p295, %p296
      %p298 = pneg %p297
      // Predicated region
      $region45: #{tpu_custom_call.1} parent=5 // pred_check
        _
      $region46: #{tpu_custom_call.1} parent=5 // pred_check_branch
        %300 = sbr.rel (%p297) target = $region48
      $region47: #{tpu_custom_call.1} parent=5 // pred_region
        %s301 = ssub.s32 %s21, 1
        %s302 = sand.u32 %s34, 1
        %s303 = scalar_lea.sflag [#allocation3], %s302
        %s304 = sand.u32 %s34, 1
        %s305 = smul.addr %s304, 8
        %s306 = scalar_lea.vmem [#allocation2], %s305
        // Predicated region
        $region49: #{tpu_custom_call.1} parent=47 // pred_check
          %p307 = pneg %p47
        $region50: #{tpu_custom_call.1} parent=47 // pred_check_branch
          %309 = sbr.rel (%p307) target = $region52
        $region51: #{tpu_custom_call.1} parent=47 // pred_region
          %311 = dma.done %s303, 128
        $region52: #{tpu_custom_call.1} parent=47 // pred_fallthru
          _
        // Predicated region
        $region53: #{tpu_custom_call.1} parent=47 // pred_check
          %p312 = pneg %p68
        $region54: #{tpu_custom_call.1} parent=47 // pred_check_branch
          %314 = sbr.rel (%p312) target = $region56
        $region55: #{tpu_custom_call.1} parent=47 // pred_region
          %316 = dma.done [#allocation6], 16
        $region56: #{tpu_custom_call.1} parent=47 // pred_fallthru
          _
        // Predicated region
        $region57: #{tpu_custom_call.1} parent=47 // pred_check
          %p317 = pneg %p110
        $region58: #{tpu_custom_call.1} parent=47 // pred_check_branch
          %319 = sbr.rel (%p317) target = $region60
        $region59: #{tpu_custom_call.1} parent=47 // pred_region
          %321 = dma.done [#allocation6], 4096
        $region60: #{tpu_custom_call.1} parent=47 // pred_fallthru
          _
        // Predicated region
        $region61: #{tpu_custom_call.1} parent=47 // pred_check
          %p322 = pneg %p131
        $region62: #{tpu_custom_call.1} parent=47 // pred_check_branch
          %324 = sbr.rel (%p322) target = $region64
        $region63: #{tpu_custom_call.1} parent=47 // pred_region
          %326 = dma.done [#allocation9], 64
        $region64: #{tpu_custom_call.1} parent=47 // pred_fallthru
          _
        // Predicated region
        $region65: #{tpu_custom_call.1} parent=47 // pred_check
          %p327 = pneg %p152
        $region66: #{tpu_custom_call.1} parent=47 // pred_check_branch
          %329 = sbr.rel (%p327) target = $region68
        $region67: #{tpu_custom_call.1} parent=47 // pred_region
          %331 = dma.done [#allocation9], 4096
        $region68: #{tpu_custom_call.1} parent=47 // pred_fallthru
          _
        %s332 = sand.u32 %s34, 1
        %s333 = scalar_lea.sflag [#allocation3], %s332
        %s334 = sand.u32 %s34, 1
        %s335 = smul.addr %s334, 8
        %s336 = scalar_lea.vmem [#allocation2], %s335
        %p337 = pneg %p47
        %p338 = pneg %p44
        %p339 = pneg %p68
        %p340 = pneg %p65
        %p341 = pneg %p89
        %p342 = pneg %p86
        %p343 = pneg %p110
        %p344 = pneg %p107
        %p345 = pneg %p131
        %p346 = pneg %p128
        %p347 = pneg %p152
        %p348 = pneg %p149
        %p349 = pneg %p173
        %p350 = pneg %p170
        %p351 = pneg %p199
        %p352 = pneg %p196
        %s353 = sand.u32 %s186, 1
        %s354 = scalar_lea.sflag [#allocation4], %s353
        %s355 = sand.u32 %s186, 1
        %s356 = smul.addr %s355, 8
        %s357 = scalar_lea.vmem [#allocation11], %s356
        %v358 = vld [vmem:[%s306] sm:$0xff]
        %359 = vadd.xlane.f32.xlu0 %v358
        %v360 = vpop.xlane.xlu0 %359
        %v361 = vmul.f32 %v360, 0.0078125
        %v362 = vmul.f32 %v358, %v358
        %363 = vadd.xlane.f32.xlu0 %v362
        %v364 = vpop.xlane.xlu0 %363
        %v365 = vmul.f32 %v364, 0.0078125
        %v366 = vmul.f32 %v361, %v361
        %v367 = vsub.f32 %v365, %v366
        %v368 = vsub.f32 %v358, %v361
        %v369 = vadd.f32 %v367, 1e-05
        %v370 = vrsqrt.pop %v369
        %v371 = vmul.f32 %v370, %v369
        %v372 = vmul.f32 %v371, %v370
        %v373 = vmul.f32 0.5, %v372
        %v374 = vsub.f32 1.5, %v373
        %v375 = vmul.f32 %v370, %v374
        %vm376 = vweird.f32 %v369
        %vm377 = vweird.f32 %v370
        %vm378 = vmor %vm376, %vm377
        %v379 = vsel %vm378, %v370, %v375
        %v380 = vmul.f32 %v368, %v379
        %v381 = vld [vmem:[#allocation5] sm:$0x1]
        %v383 = vperm.slane %v381, 0
        %v385 = vmul.f32 %v380, %v383
        %v386 = vld [vmem:[%s2] sm:$0x1]
        %v388 = vperm.slane %v386, 0
        %v390 = vadd.f32 %v385, %v388
        %v391 = vpack.c.bf16 %v390, %v390
        %v392 = vld [vmem:[#allocation7] sm:$0xff]
        %v393 = vld [vmem:[#allocation7 + $0x8] sm:$0xff]
        %v394 = vld [vmem:[#allocation7 + $0x10] sm:$0xff]
        %v395 = vld [vmem:[#allocation7 + $0x18] sm:$0xff]
        %v396 = vld [vmem:[#allocation7 + $0x20] sm:$0xff]
        %v397 = vld [vmem:[#allocation7 + $0x28] sm:$0xff]
        %v398 = vld [vmem:[#allocation7 + $0x30] sm:$0xff]
        %v399 = vld [vmem:[#allocation7 + $0x38] sm:$0xff]
        %v400 = vld [vmem:[#allocation7 + $0x40] sm:$0xff]
        %v401 = vld [vmem:[#allocation7 + $0x48] sm:$0xff]
        %v402 = vld [vmem:[#allocation7 + $0x50] sm:$0xff]
        %v403 = vld [vmem:[#allocation7 + $0x58] sm:$0xff]
        %v404 = vld [vmem:[#allocation7 + $0x60] sm:$0xff]
        %v405 = vld [vmem:[#allocation7 + $0x68] sm:$0xff]
        %v406 = vld [vmem:[#allocation7 + $0x70] sm:$0xff]
        %v407 = vld [vmem:[#allocation7 + $0x78] sm:$0xff]
        %v408 = vld [vmem:[#allocation7 + $0x80] sm:$0xff]
        %v409 = vld [vmem:[#allocation7 + $0x88] sm:$0xff]
        %v410 = vld [vmem:[#allocation7 + $0x90] sm:$0xff]
        %v411 = vld [vmem:[#allocation7 + $0x98] sm:$0xff]
        %v412 = vld [vmem:[#allocation7 + $0xa0] sm:$0xff]
        %v413 = vld [vmem:[#allocation7 + $0xa8] sm:$0xff]
        %v414 = vld [vmem:[#allocation7 + $0xb0] sm:$0xff]
        %v415 = vld [vmem:[#allocation7 + $0xb8] sm:$0xff]
        %v416 = vld [vmem:[#allocation7 + $0xc0] sm:$0xff]
        %v417 = vld [vmem:[#allocation7 + $0xc8] sm:$0xff]
        %v418 = vld [vmem:[#allocation7 + $0xd0] sm:$0xff]
        %v419 = vld [vmem:[#allocation7 + $0xd8] sm:$0xff]
        %v420 = vld [vmem:[#allocation7 + $0xe0] sm:$0xff]
        %v421 = vld [vmem:[#allocation7 + $0xe8] sm:$0xff]
        %v422 = vld [vmem:[#allocation7 + $0xf0] sm:$0xff]
        %v423 = vld [vmem:[#allocation7 + $0xf8] sm:$0xff]
        %v424 = vld [vmem:[#allocation8] sm:$0xf]
        %v426 = vperm.slane %v424, 0
        %v427 = vperm.slane %v424, 1
        %v428 = vperm.slane %v424, 2
        %v429 = vperm.slane %v424, 3
        %v466 = vunpack.c.l.b16 %v392
        %v467 = vunpack.c.h.b16 %v392
        %v468 = vunpack.c.l.b16 %v393
        %v469 = vunpack.c.h.b16 %v393
        %v470 = vunpack.c.l.b16 %v394
        %v471 = vunpack.c.h.b16 %v394
        %v472 = vunpack.c.l.b16 %v395
        %v473 = vunpack.c.h.b16 %v395
        %v474 = vunpack.c.l.b16 %v396
        %v475 = vunpack.c.h.b16 %v396
        %v476 = vunpack.c.l.b16 %v397
        %v477 = vunpack.c.h.b16 %v397
        %v478 = vunpack.c.l.b16 %v398
        %v479 = vunpack.c.h.b16 %v398
        %v480 = vunpack.c.l.b16 %v399
        %v481 = vunpack.c.h.b16 %v399
        %v482 = vunpack.c.l.b16 %v400
        %v483 = vunpack.c.h.b16 %v400
        %v484 = vunpack.c.l.b16 %v401
        %v485 = vunpack.c.h.b16 %v401
        %v486 = vunpack.c.l.b16 %v402
        %v487 = vunpack.c.h.b16 %v402
        %v488 = vunpack.c.l.b16 %v403
        %v489 = vunpack.c.h.b16 %v403
        %v490 = vunpack.c.l.b16 %v404
        %v491 = vunpack.c.h.b16 %v404
        %v492 = vunpack.c.l.b16 %v405
        %v493 = vunpack.c.h.b16 %v405
        %v494 = vunpack.c.l.b16 %v406
        %v495 = vunpack.c.h.b16 %v406
        %v496 = vunpack.c.l.b16 %v407
        %v497 = vunpack.c.h.b16 %v407
        %v498 = vunpack.c.l.b16 %v408
        %v499 = vunpack.c.h.b16 %v408
        %v500 = vunpack.c.l.b16 %v409
        %v501 = vunpack.c.h.b16 %v409
        %v502 = vunpack.c.l.b16 %v410
        %v503 = vunpack.c.h.b16 %v410
        %v504 = vunpack.c.l.b16 %v411
        %v505 = vunpack.c.h.b16 %v411
        %v506 = vunpack.c.l.b16 %v412
        %v507 = vunpack.c.h.b16 %v412
        %v508 = vunpack.c.l.b16 %v413
        %v509 = vunpack.c.h.b16 %v413
        %v510 = vunpack.c.l.b16 %v414
        %v511 = vunpack.c.h.b16 %v414
        %v512 = vunpack.c.l.b16 %v415
        %v513 = vunpack.c.h.b16 %v415
        %v514 = vunpack.c.l.b16 %v416
        %v515 = vunpack.c.h.b16 %v416
        %v516 = vunpack.c.l.b16 %v417
        %v517 = vunpack.c.h.b16 %v417
        %v518 = vunpack.c.l.b16 %v418
        %v519 = vunpack.c.h.b16 %v418
        %v520 = vunpack.c.l.b16 %v419
        %v521 = vunpack.c.h.b16 %v419
        %v522 = vunpack.c.l.b16 %v420
        %v523 = vunpack.c.h.b16 %v420
        %v524 = vunpack.c.l.b16 %v421
        %v525 = vunpack.c.h.b16 %v421
        %v526 = vunpack.c.l.b16 %v422
        %v527 = vunpack.c.h.b16 %v422
        %v528 = vunpack.c.l.b16 %v423
        %v529 = vunpack.c.h.b16 %v423
        %v530 = vpack.c.b16 %v470, %v466
        %v531 = vpack.c.b16 %v471, %v467
        %v532 = vpack.c.b16 %v472, %v468
        %v533 = vpack.c.b16 %v473, %v469
        %v534 = vpack.c.b16 %v478, %v474
        %v535 = vpack.c.b16 %v479, %v475
        %v536 = vpack.c.b16 %v480, %v476
        %v537 = vpack.c.b16 %v481, %v477
        %v538 = vpack.c.b16 %v486, %v482
        %v539 = vpack.c.b16 %v487, %v483
        %v540 = vpack.c.b16 %v488, %v484
        %v541 = vpack.c.b16 %v489, %v485
        %v542 = vpack.c.b16 %v494, %v490
        %v543 = vpack.c.b16 %v495, %v491
        %v544 = vpack.c.b16 %v496, %v492
        %v545 = vpack.c.b16 %v497, %v493
        %v546 = vpack.c.b16 %v502, %v498
        %v547 = vpack.c.b16 %v503, %v499
        %v548 = vpack.c.b16 %v504, %v500
        %v549 = vpack.c.b16 %v505, %v501
        %v550 = vpack.c.b16 %v510, %v506
        %v551 = vpack.c.b16 %v511, %v507
        %v552 = vpack.c.b16 %v512, %v508
        %v553 = vpack.c.b16 %v513, %v509
        %v554 = vpack.c.b16 %v518, %v514
        %v555 = vpack.c.b16 %v519, %v515
        %v556 = vpack.c.b16 %v520, %v516
        %v557 = vpack.c.b16 %v521, %v517
        %v558 = vpack.c.b16 %v526, %v522
        %v559 = vpack.c.b16 %v527, %v523
        %v560 = vpack.c.b16 %v528, %v524
        %v561 = vpack.c.b16 %v529, %v525
        %594 = vmatpush.bf16.msra.mxu0 %v558
        %595 = vmatpush.bf16.msra.mxu0 %v554
        %596 = vmatpush.bf16.msra.mxu0 %v550
        %597 = vmatpush.bf16.msra.mxu0 %v546
        %598 = vmatpush.bf16.msra.mxu0 %v542
        %599 = vmatpush.bf16.msra.mxu0 %v538
        %600 = vmatpush.bf16.msra.mxu0 %v534
        %601 = vmatpush.bf16.msra.mxu0 %v530
        %602 = vmatmul.bf16.gmra.mxu0 %v391
        %v603 = vpop.f32.mrf.mxu0
        %v604 = vadd.f32 %v426, %v603
        %v605 = vpop.f32.mrf.mxu0
        %606 = vdwg.mxu0
        %607 = vmatpush.bf16.msra.mxu0 %v559
        %608 = vmatpush.bf16.msra.mxu0 %v555
        %609 = vmatpush.bf16.msra.mxu0 %v551
        %610 = vmatpush.bf16.msra.mxu0 %v547
        %611 = vmatpush.bf16.msra.mxu0 %v543
        %612 = vmatpush.bf16.msra.mxu0 %v539
        %613 = vmatpush.bf16.msra.mxu0 %v535
        %614 = vmatpush.bf16.msra.mxu0 %v531
        %615 = vmatmul.bf16.gmra.mxu0 %v391
        %v616 = vpop.f32.mrf.mxu0
        %v617 = vadd.f32 %v427, %v616
        %v618 = vpop.f32.mrf.mxu0
        %619 = vdwg.mxu0
        %620 = vmatpush.bf16.msra.mxu0 %v560
        %621 = vmatpush.bf16.msra.mxu0 %v556
        %622 = vmatpush.bf16.msra.mxu0 %v552
        %623 = vmatpush.bf16.msra.mxu0 %v548
        %624 = vmatpush.bf16.msra.mxu0 %v544
        %625 = vmatpush.bf16.msra.mxu0 %v540
        %626 = vmatpush.bf16.msra.mxu0 %v536
        %627 = vmatpush.bf16.msra.mxu0 %v532
        %628 = vmatmul.bf16.gmra.mxu0 %v391
        %v629 = vpop.f32.mrf.mxu0
        %v630 = vadd.f32 %v428, %v629
        %v631 = vpop.f32.mrf.mxu0
        %632 = vdwg.mxu0
        %633 = vmatpush.bf16.msra.mxu0 %v561
        %634 = vmatpush.bf16.msra.mxu0 %v557
        %635 = vmatpush.bf16.msra.mxu0 %v553
        %636 = vmatpush.bf16.msra.mxu0 %v549
        %637 = vmatpush.bf16.msra.mxu0 %v545
        %638 = vmatpush.bf16.msra.mxu0 %v541
        %639 = vmatpush.bf16.msra.mxu0 %v537
        %640 = vmatpush.bf16.msra.mxu0 %v533
        %641 = vmatmul.bf16.gmra.mxu0 %v391
        %v642 = vpop.f32.mrf.mxu0
        %v643 = vadd.f32 %v429, %v642
        %v644 = vpop.f32.mrf.mxu0
        %645 = vdwg.mxu0
        %v646 = vand.u32 2147483647, %v604
        %v647 = vand.u32 2147483647, %v617
        %v648 = vand.u32 2147483647, %v630
        %v649 = vand.u32 2147483647, %v643
        %v650 = vmul.f32 %v646, 0.70710677
        %v651 = vmul.f32 %v647, 0.70710677
        %v652 = vmul.f32 %v648, 0.70710677
        %v653 = vmul.f32 %v649, 0.70710677
        %v654 = vmul.f32 %v650, 0.3275911
        %v655 = vmul.f32 %v651, 0.3275911
        %v656 = vmul.f32 %v652, 0.3275911
        %v657 = vmul.f32 %v653, 0.3275911
        %v658 = vadd.f32 %v654, 1.0
        %v659 = vadd.f32 %v655, 1.0
        %v660 = vadd.f32 %v656, 1.0
        %v661 = vadd.f32 %v657, 1.0
        %v662 = vrcp.pop %v658
        %v663 = vrcp.pop %v659
        %v664 = vrcp.pop %v660
        %v665 = vrcp.pop %v661
        %v666 = vmul.f32 %v662, 1.0614054
        %v667 = vmul.f32 %v663, 1.0614054
        %v668 = vmul.f32 %v664, 1.0614054
        %v669 = vmul.f32 %v665, 1.0614054
        %v670 = vadd.f32 %v666, -1.4531521
        %v671 = vadd.f32 %v667, -1.4531521
        %v672 = vadd.f32 %v668, -1.4531521
        %v673 = vadd.f32 %v669, -1.4531521
        %v674 = vmul.f32 %v670, %v662
        %v675 = vmul.f32 %v671, %v663
        %v676 = vmul.f32 %v672, %v664
        %v677 = vmul.f32 %v673, %v665
        %v678 = vadd.f32 %v674, 1.4214138
        %v679 = vadd.f32 %v675, 1.4214138
        %v680 = vadd.f32 %v676, 1.4214138
        %v681 = vadd.f32 %v677, 1.4214138
        %v682 = vmul.f32 %v678, %v662
        %v683 = vmul.f32 %v679, %v663
        %v684 = vmul.f32 %v680, %v664
        %v685 = vmul.f32 %v681, %v665
        %v686 = vadd.f32 %v682, -0.28449672
        %v687 = vadd.f32 %v683, -0.28449672
        %v688 = vadd.f32 %v684, -0.28449672
        %v689 = vadd.f32 %v685, -0.28449672
        %v690 = vmul.f32 %v686, %v662
        %v691 = vmul.f32 %v687, %v663
        %v692 = vmul.f32 %v688, %v664
        %v693 = vmul.f32 %v689, %v665
        %v694 = vadd.f32 %v690, 0.2548296
        %v695 = vadd.f32 %v691, 0.2548296
        %v696 = vadd.f32 %v692, 0.2548296
        %v697 = vadd.f32 %v693, 0.2548296
        %v698 = vmul.f32 %v694, %v662
        %v699 = vmul.f32 %v695, %v663
        %v700 = vmul.f32 %v696, %v664
        %v701 = vmul.f32 %v697, %v665
        %v702 = vsub.f32 0.0, %v650
        %v703 = vsub.f32 0.0, %v651
        %v704 = vsub.f32 0.0, %v652
        %v705 = vsub.f32 0.0, %v653
        %v706 = vmul.f32 %v702, %v650
        %v707 = vmul.f32 %v703, %v651
        %v708 = vmul.f32 %v704, %v652
        %v709 = vmul.f32 %v705, %v653
        %v710 = vmul.f32 %v706, 1.442695
        %v711 = vpow.pop %v710
        %v712 = vmul.f32 %v707, 1.442695
        %v713 = vpow.pop %v712
        %v714 = vmul.f32 %v708, 1.442695
        %v715 = vpow.pop %v714
        %v716 = vmul.f32 %v709, 1.442695
        %v717 = vpow.pop %v716
        %v718 = vmul.f32 %v698, %v711
        %v719 = vmul.f32 %v699, %v713
        %v720 = vmul.f32 %v700, %v715
        %v721 = vmul.f32 %v701, %v717
        %v722 = vmax.f32 %v604, 0.0
        %v723 = vmax.f32 %v617, 0.0
        %v724 = vmax.f32 %v630, 0.0
        %v725 = vmax.f32 %v643, 0.0
        %v726 = vmul.f32 %v650, 0.70710677
        %v727 = vmul.f32 %v651, 0.70710677
        %v728 = vmul.f32 %v652, 0.70710677
        %v729 = vmul.f32 %v653, 0.70710677
        %v730 = vmul.f32 %v726, %v718
        %v731 = vmul.f32 %v727, %v719
        %v732 = vmul.f32 %v728, %v720
        %v733 = vmul.f32 %v729, %v721
        %v734 = vsub.f32 %v722, %v730
        %v735 = vsub.f32 %v723, %v731
        %v736 = vsub.f32 %v724, %v732
        %v737 = vsub.f32 %v725, %v733
        %v738 = vpack.c.bf16 %v734, %v734
        %v739 = vpack.c.bf16 %v735, %v735
        %v740 = vpack.c.bf16 %v736, %v736
        %v741 = vpack.c.bf16 %v737, %v737
        %v742 = vld [vmem:[#allocation10] sm:$0xf]
        %v743 = vld [vmem:[#allocation10 + $0x4] sm:$0xf]
        %v744 = vld [vmem:[#allocation10 + $0x8] sm:$0xf]
        %v745 = vld [vmem:[#allocation10 + $0xc] sm:$0xf]
        %v746 = vld [vmem:[#allocation10 + $0x10] sm:$0xf]
        %v747 = vld [vmem:[#allocation10 + $0x14] sm:$0xf]
        %v748 = vld [vmem:[#allocation10 + $0x18] sm:$0xf]
        %v749 = vld [vmem:[#allocation10 + $0x1c] sm:$0xf]
        %v750 = vld [vmem:[#allocation10 + $0x20] sm:$0xf]
        %v751 = vld [vmem:[#allocation10 + $0x24] sm:$0xf]
        %v752 = vld [vmem:[#allocation10 + $0x28] sm:$0xf]
        %v753 = vld [vmem:[#allocation10 + $0x2c] sm:$0xf]
        %v754 = vld [vmem:[#allocation10 + $0x30] sm:$0xf]
        %v755 = vld [vmem:[#allocation10 + $0x34] sm:$0xf]
        %v756 = vld [vmem:[#allocation10 + $0x38] sm:$0xf]
        %v757 = vld [vmem:[#allocation10 + $0x3c] sm:$0xf]
        %v758 = vld [vmem:[#allocation10 + $0x40] sm:$0xf]
        %v759 = vld [vmem:[#allocation10 + $0x44] sm:$0xf]
        %v760 = vld [vmem:[#allocation10 + $0x48] sm:$0xf]
        %v761 = vld [vmem:[#allocation10 + $0x4c] sm:$0xf]
        %v762 = vld [vmem:[#allocation10 + $0x50] sm:$0xf]
        %v763 = vld [vmem:[#allocation10 + $0x54] sm:$0xf]
        %v764 = vld [vmem:[#allocation10 + $0x58] sm:$0xf]
        %v765 = vld [vmem:[#allocation10 + $0x5c] sm:$0xf]
        %v766 = vld [vmem:[#allocation10 + $0x60] sm:$0xf]
        %v767 = vld [vmem:[#allocation10 + $0x64] sm:$0xf]
        %v768 = vld [vmem:[#allocation10 + $0x68] sm:$0xf]
        %v769 = vld [vmem:[#allocation10 + $0x6c] sm:$0xf]
        %v770 = vld [vmem:[#allocation10 + $0x70] sm:$0xf]
        %v771 = vld [vmem:[#allocation10 + $0x74] sm:$0xf]
        %v772 = vld [vmem:[#allocation10 + $0x78] sm:$0xf]
        %v773 = vld [vmem:[#allocation10 + $0x7c] sm:$0xf]
        %v774 = vld [vmem:[#allocation10 + $0x80] sm:$0xf]
        %v775 = vld [vmem:[#allocation10 + $0x84] sm:$0xf]
        %v776 = vld [vmem:[#allocation10 + $0x88] sm:$0xf]
        %v777 = vld [vmem:[#allocation10 + $0x8c] sm:$0xf]
        %v778 = vld [vmem:[#allocation10 + $0x90] sm:$0xf]
        %v779 = vld [vmem:[#allocation10 + $0x94] sm:$0xf]
        %v780 = vld [vmem:[#allocation10 + $0x98] sm:$0xf]
        %v781 = vld [vmem:[#allocation10 + $0x9c] sm:$0xf]
        %v782 = vld [vmem:[#allocation10 + $0xa0] sm:$0xf]
        %v783 = vld [vmem:[#allocation10 + $0xa4] sm:$0xf]
        %v784 = vld [vmem:[#allocation10 + $0xa8] sm:$0xf]
        %v785 = vld [vmem:[#allocation10 + $0xac] sm:$0xf]
        %v786 = vld [vmem:[#allocation10 + $0xb0] sm:$0xf]
        %v787 = vld [vmem:[#allocation10 + $0xb4] sm:$0xf]
        %v788 = vld [vmem:[#allocation10 + $0xb8] sm:$0xf]
        %v789 = vld [vmem:[#allocation10 + $0xbc] sm:$0xf]
        %v790 = vld [vmem:[#allocation10 + $0xc0] sm:$0xf]
        %v791 = vld [vmem:[#allocation10 + $0xc4] sm:$0xf]
        %v792 = vld [vmem:[#allocation10 + $0xc8] sm:$0xf]
        %v793 = vld [vmem:[#allocation10 + $0xcc] sm:$0xf]
        %v794 = vld [vmem:[#allocation10 + $0xd0] sm:$0xf]
        %v795 = vld [vmem:[#allocation10 + $0xd4] sm:$0xf]
        %v796 = vld [vmem:[#allocation10 + $0xd8] sm:$0xf]
        %v797 = vld [vmem:[#allocation10 + $0xdc] sm:$0xf]
        %v798 = vld [vmem:[#allocation10 + $0xe0] sm:$0xf]
        %v799 = vld [vmem:[#allocation10 + $0xe4] sm:$0xf]
        %v800 = vld [vmem:[#allocation10 + $0xe8] sm:$0xf]
        %v801 = vld [vmem:[#allocation10 + $0xec] sm:$0xf]
        %v802 = vld [vmem:[#allocation10 + $0xf0] sm:$0xf]
        %v803 = vld [vmem:[#allocation10 + $0xf4] sm:$0xf]
        %v804 = vld [vmem:[#allocation10 + $0xf8] sm:$0xf]
        %v805 = vld [vmem:[#allocation10 + $0xfc] sm:$0xf]
        %v806 = vld [vmem:[%s6] sm:$0x1]
        %v808 = vperm.slane %v806, 0
        %v874 = vunpack.c.l.b16 %v742
        %v875 = vunpack.c.l.b16 %v743
        %v876 = vunpack.c.l.b16 %v744
        %v877 = vunpack.c.l.b16 %v745
        %v878 = vunpack.c.l.b16 %v746
        %v879 = vunpack.c.l.b16 %v747
        %v880 = vunpack.c.l.b16 %v748
        %v881 = vunpack.c.l.b16 %v749
        %v882 = vunpack.c.l.b16 %v750
        %v883 = vunpack.c.l.b16 %v751
        %v884 = vunpack.c.l.b16 %v752
        %v885 = vunpack.c.l.b16 %v753
        %v886 = vunpack.c.l.b16 %v754
        %v887 = vunpack.c.l.b16 %v755
        %v888 = vunpack.c.l.b16 %v756
        %v889 = vunpack.c.l.b16 %v757
        %v890 = vunpack.c.l.b16 %v758
        %v891 = vunpack.c.l.b16 %v759
        %v892 = vunpack.c.l.b16 %v760
        %v893 = vunpack.c.l.b16 %v761
        %v894 = vunpack.c.l.b16 %v762
        %v895 = vunpack.c.l.b16 %v763
        %v896 = vunpack.c.l.b16 %v764
        %v897 = vunpack.c.l.b16 %v765
        %v898 = vunpack.c.l.b16 %v766
        %v899 = vunpack.c.l.b16 %v767
        %v900 = vunpack.c.l.b16 %v768
        %v901 = vunpack.c.l.b16 %v769
        %v902 = vunpack.c.l.b16 %v770
        %v903 = vunpack.c.l.b16 %v771
        %v904 = vunpack.c.l.b16 %v772
        %v905 = vunpack.c.l.b16 %v773
        %v906 = vunpack.c.l.b16 %v774
        %v907 = vunpack.c.l.b16 %v775
        %v908 = vunpack.c.l.b16 %v776
        %v909 = vunpack.c.l.b16 %v777
        %v910 = vunpack.c.l.b16 %v778
        %v911 = vunpack.c.l.b16 %v779
        %v912 = vunpack.c.l.b16 %v780
        %v913 = vunpack.c.l.b16 %v781
        %v914 = vunpack.c.l.b16 %v782
        %v915 = vunpack.c.l.b16 %v783
        %v916 = vunpack.c.l.b16 %v784
        %v917 = vunpack.c.l.b16 %v785
        %v918 = vunpack.c.l.b16 %v786
        %v919 = vunpack.c.l.b16 %v787
        %v920 = vunpack.c.l.b16 %v788
        %v921 = vunpack.c.l.b16 %v789
        %v922 = vunpack.c.l.b16 %v790
        %v923 = vunpack.c.l.b16 %v791
        %v924 = vunpack.c.l.b16 %v792
        %v925 = vunpack.c.l.b16 %v793
        %v926 = vunpack.c.l.b16 %v794
        %v927 = vunpack.c.l.b16 %v795
        %v928 = vunpack.c.l.b16 %v796
        %v929 = vunpack.c.l.b16 %v797
        %v930 = vunpack.c.l.b16 %v798
        %v931 = vunpack.c.l.b16 %v799
        %v932 = vunpack.c.l.b16 %v800
        %v933 = vunpack.c.l.b16 %v801
        %v934 = vunpack.c.l.b16 %v802
        %v935 = vunpack.c.l.b16 %v803
        %v936 = vunpack.c.l.b16 %v804
        %v937 = vunpack.c.l.b16 %v805
        %v938 = vpack.c.b16 %v875, %v874
        %v939 = vpack.c.b16 %v877, %v876
        %v940 = vpack.c.b16 %v879, %v878
        %v941 = vpack.c.b16 %v881, %v880
        %v942 = vpack.c.b16 %v883, %v882
        %v943 = vpack.c.b16 %v885, %v884
        %v944 = vpack.c.b16 %v887, %v886
        %v945 = vpack.c.b16 %v889, %v888
        %v946 = vpack.c.b16 %v891, %v890
        %v947 = vpack.c.b16 %v893, %v892
        %v948 = vpack.c.b16 %v895, %v894
        %v949 = vpack.c.b16 %v897, %v896
        %v950 = vpack.c.b16 %v899, %v898
        %v951 = vpack.c.b16 %v901, %v900
        %v952 = vpack.c.b16 %v903, %v902
        %v953 = vpack.c.b16 %v905, %v904
        %v954 = vpack.c.b16 %v907, %v906
        %v955 = vpack.c.b16 %v909, %v908
        %v956 = vpack.c.b16 %v911, %v910
        %v957 = vpack.c.b16 %v913, %v912
        %v958 = vpack.c.b16 %v915, %v914
        %v959 = vpack.c.b16 %v917, %v916
        %v960 = vpack.c.b16 %v919, %v918
        %v961 = vpack.c.b16 %v921, %v920
        %v962 = vpack.c.b16 %v923, %v922
        %v963 = vpack.c.b16 %v925, %v924
        %v964 = vpack.c.b16 %v927, %v926
        %v965 = vpack.c.b16 %v929, %v928
        %v966 = vpack.c.b16 %v931, %v930
        %v967 = vpack.c.b16 %v933, %v932
        %v968 = vpack.c.b16 %v935, %v934
        %v969 = vpack.c.b16 %v937, %v936
        %1002 = vmatpush.bf16.msra.mxu0 %v945
        %1003 = vmatpush.bf16.msra.mxu0 %v944
        %1004 = vmatpush.bf16.msra.mxu0 %v943
        %1005 = vmatpush.bf16.msra.mxu0 %v942
        %1006 = vmatpush.bf16.msra.mxu0 %v941
        %1007 = vmatpush.bf16.msra.mxu0 %v940
        %1008 = vmatpush.bf16.msra.mxu0 %v939
        %1009 = vmatpush.bf16.msra.mxu0 %v938
        %1010 = vmatmul.bf16.gmra.mxu0 %v738
        %v1011 = vpop.f32.mrf.mxu0
        %v1012 = vadd.f32 %v808, %v1011
        %v1013 = vpop.f32.mrf.mxu0
        %1014 = vdwg.mxu0
        %1015 = vmatpush.bf16.msra.mxu0 %v953
        %1016 = vmatpush.bf16.msra.mxu0 %v952
        %1017 = vmatpush.bf16.msra.mxu0 %v951
        %1018 = vmatpush.bf16.msra.mxu0 %v950
        %1019 = vmatpush.bf16.msra.mxu0 %v949
        %1020 = vmatpush.bf16.msra.mxu0 %v948
        %1021 = vmatpush.bf16.msra.mxu0 %v947
        %1022 = vmatpush.bf16.msra.mxu0 %v946
        %1023 = vmatmul.bf16.gmra.mxu0 %v739
        %v1024 = vpop.f32.mrf.mxu0
        %v1025 = vadd.f32 %v1012, %v1024
        %v1026 = vpop.f32.mrf.mxu0
        %1027 = vdwg.mxu0
        %1028 = vmatpush.bf16.msra.mxu0 %v961
        %1029 = vmatpush.bf16.msra.mxu0 %v960
        %1030 = vmatpush.bf16.msra.mxu0 %v959
        %1031 = vmatpush.bf16.msra.mxu0 %v958
        %1032 = vmatpush.bf16.msra.mxu0 %v957
        %1033 = vmatpush.bf16.msra.mxu0 %v956
        %1034 = vmatpush.bf16.msra.mxu0 %v955
        %1035 = vmatpush.bf16.msra.mxu0 %v954
        %1036 = vmatmul.bf16.gmra.mxu0 %v740
        %v1037 = vpop.f32.mrf.mxu0
        %v1038 = vadd.f32 %v1025, %v1037
        %v1039 = vpop.f32.mrf.mxu0
        %1040 = vdwg.mxu0
        %1041 = vmatpush.bf16.msra.mxu0 %v969
        %1042 = vmatpush.bf16.msra.mxu0 %v968
        %1043 = vmatpush.bf16.msra.mxu0 %v967
        %1044 = vmatpush.bf16.msra.mxu0 %v966
        %1045 = vmatpush.bf16.msra.mxu0 %v965
        %1046 = vmatpush.bf16.msra.mxu0 %v964
        %1047 = vmatpush.bf16.msra.mxu0 %v963
        %1048 = vmatpush.bf16.msra.mxu0 %v962
        %1049 = vmatmul.bf16.gmra.mxu0 %v741
        %v1050 = vpop.f32.mrf.mxu0
        %v1051 = vadd.f32 %v1038, %v1050
        %v1052 = vpop.f32.mrf.mxu0
        %1053 = vdwg.mxu0
        %1054 = vst [vmem:[%s357] sm:$0xff] %v1051
        %s1055 = sand.u32 %s186, 1
        %s1056 = scalar_lea.sflag [#allocation4], %s1055
        %s1057 = sand.u32 %s186, 1
        %s1058 = smul.addr %s1057, 8
        %s1059 = scalar_lea.vmem [#allocation11], %s1058
        // Predicated region
        $region69: #{tpu_custom_call.1} parent=47 // pred_check
          %p1060 = pneg %p196
        $region70: #{tpu_custom_call.1} parent=47 // pred_check_branch
          %1062 = sbr.rel (%p1060) target = $region72
        $region71: #{tpu_custom_call.1} parent=47 // pred_region
          %1064 = vsyncadd %s1056, 0
          %s1065 = smul.addr %s26, 8
          %s1066 = scalar_lea.hbm %s7, %s1065
          %s1068 = sshll.u32 %s1059, 4
          %s1069 = int_to_ptr.vmem [resolvable:$true] %s1068
          %s1070 = sshll.u32 %s1066, 4
          %s1071 = int_to_ptr.hbm [resolvable:$true] %s1070
          %1073 = dma.vmem_to_hbm [thread:$0]  %s1069, 128, %s1071, %s1056
        $region72: #{tpu_custom_call.1} parent=47 // pred_fallthru
          _
      $region48: #{tpu_custom_call.1} parent=5 // pred_fallthru
        _
      %p1074 = scmp.le.s32.totalorder 2, %s21
      // Predicated region
      $region73: #{tpu_custom_call.1} parent=5 // pred_check
        %p1075 = pneg %p1074
      $region74: #{tpu_custom_call.1} parent=5 // pred_check_branch
        %1077 = sbr.rel (%p1075) target = $region76
      $region75: #{tpu_custom_call.1} parent=5 // pred_region
        %s1078 = ssub.s32 %s21, 2
        // Predicated region
        $region77: #{tpu_custom_call.1} parent=75 // pred_check
          %p1079 = pneg %p202
        $region78: #{tpu_custom_call.1} parent=75 // pred_check_branch
          %1081 = sbr.rel (%p1079) target = $region80
        $region79: #{tpu_custom_call.1} parent=75 // pred_region
          %s1082 = sand.u32 %s187, 1
          %s1083 = scalar_lea.sflag [#allocation4], %s1082
          %s1084 = sand.u32 %s187, 1
          %s1085 = smul.addr %s1084, 8
          %s1086 = scalar_lea.vmem [#allocation11], %s1085
          %1088 = dma.done %s1083, 128
        $region80: #{tpu_custom_call.1} parent=75 // pred_fallthru
          _
      $region76: #{tpu_custom_call.1} parent=5 // pred_fallthru
        _
    $region6: #{tpu_custom_call.1} parent=1 // loop_footer
      %s25 = sadd.s32 1, %s21
    $region7: #{tpu_custom_call.1} parent=1 // loop_footer_branch
      %20 = sbr.rel target = $region3
    $region8: #{tpu_custom_call.1} parent=1 // loop_exit
      _
    %1089 = vsyncpa [#allocation3], 1
    %s1090 = scalar_lea.sflag [#allocation3], 1
    %1091 = vsyncpa %s1090, 1
    %1092 = vsyncpa [#allocation6], 1
    %1093 = vsyncpa [#allocation9], 1
    %1094 = vsyncpa [#allocation4], 1
    %s1095 = scalar_lea.sflag [#allocation4], 1
    %1096 = vsyncpa %s1095, 1

</llo_original>
